<compile_context>
chip_gen: v7x
topology: tpu7x:2x2x1
jax: 0.10.0
libtpu: 0.0.40
codegen_flags: <defaults>
</compile_context>

<pallas_src>
import functools

import jax
import jax.numpy as jnp
from jax.experimental import pallas as pl
from jax.experimental.pallas import tpu as pltpu


# ----------------------------- configuration --------------------------------
N_IN = 4          # n_in_channels
N_MEL = 8         # n_mel_channels
N_LAYERS = 4      # n_layers
N_CH = 16         # n_channels (must be even)
KSIZE = 3         # kernel_size (must be odd)
B = 2             # batch
T = 16            # time steps

LANES = 128       # lane-dense slab width

# input-slab lane layout: [ audio_raw | spect | 1 | 0... ]
IN_AUDIO = 0
IN_SPECT = N_IN
IN_ONE = N_IN + N_MEL

# hidden-state lane layout: [ audio_hidden | spect copy | ... 1 ... | skip accumulator | 0... ]
H_AUDIO = 0
H_SPECT = N_CH                 # 16..23
H_ONE = 24                     # constant-1 lane (used to fold biases into matmuls)
H_SKIP = 32                    # 32..47 skip accumulator

# output-slab lane layout: [ end(2*N_IN) | skip(N_CH) | 0... ]
OUT_END = 0
OUT_SKIP = 2 * N_IN

RS_ROWS = 24                   # res/skip slab rows: [0:N_CH]=weights, [N_CH]=bias, pad to 8k

assert KSIZE % 2 == 1 and N_CH % 2 == 0
assert IN_ONE < LANES
assert H_SPECT + N_MEL <= H_ONE < H_SKIP
assert H_SKIP + N_CH <= LANES
assert OUT_SKIP + N_CH <= LANES
assert RS_ROWS % 8 == 0 and RS_ROWS >= N_CH + 1


# ------------------------------ Pallas kernel -------------------------------
def wn_kernel(in_ref, wtap_ref, wrs_ref, out_ref,
              *, n_layers, n_channels, kernel_size, seq_len, n_rows):
    c = n_channels
    c2 = 2 * c
    half = (kernel_size - 1) // 2
    lanes = LANES

    xin = in_ref[...]                                    # (B*T, 128) lane-dense input slab

    # start conv + state-layout transform (one MXU matmul):
    #   h = [ audio@start_w+start_b | spect | 1 | 0 | skip=0 | 0... ]
    s_w = wtap_ref[n_layers, :, 0:lanes]                 # (128, 128)
    e_w = wtap_ref[n_layers, :, lanes:2 * lanes]         # (128, 128)
    h = jnp.dot(xin, s_w, preferred_element_type=jnp.float32)

    # (B*T, 1) column predicate base: position of every folded row within its own sequence
    row_pos = jax.lax.broadcasted_iota(jnp.int32, (n_rows, 1), 0) % seq_len

    for i in range(n_layers):
        d = 2 ** i

        # Fused dilated-tap + cond + bias matmul: (B*T,128) @ (128, K*128).
        # Each tap occupies its own 128-lane block -> all slices below are vreg-aligned.
        y = jnp.dot(h, wtap_ref[i], preferred_element_type=jnp.float32)

        # center tap already contains cond projection + (in_b + cond_b) via the 1-lane row
        z = y[:, half * lanes:(half + 1) * lanes]
        for k in range(kernel_size):
            if k == half:
                continue
            off = (k - half) * d                         # z[t] += Y_k[t + off] (zero-padded conv)
            shift = (-off) % n_rows                      # non-negative static sublane roll
            rolled = pltpu.roll(y[:, k * lanes:(k + 1) * lanes], shift=shift, axis=0)
            if off < 0:
                mask = row_pos >= (-off)                 # no in-sequence past -> zero (padding)
            else:
                mask = row_pos < (seq_len - off)         # no in-sequence future -> zero (padding)
            z = z + jnp.where(mask, rolled, 0.0)

        # fused_add_tanh_sigmoid_multiply (tanh/sigmoid go to the EUP slot)
        acts = jnp.tanh(z[:, :c]) * jax.nn.sigmoid(z[:, c:c2])        # (B*T, C)

        # res/skip 1x1 conv; bias lives in row C of the slab.  Output columns are already in
        # hidden-state lane coordinates (res -> [0:C], skip -> [H_SKIP:H_SKIP+C], rest zero),
        # so one VPU add updates the residual AND accumulates the skip path.
        rw = wrs_ref[i, 0:c, :]                          # (C, 128)
        rb = wrs_ref[i, c:c + 1, :]                      # (1, 128)
        rs = jnp.dot(acts, rw, preferred_element_type=jnp.float32) + rb
        h = h + rs                                       # last layer: res columns are zero

    # end 1x1 conv + lane-dense output packing in one matmul: [ end | skip | 0... ]
    out_ref[...] = jnp.dot(h, e_w, preferred_element_type=jnp.float32).astype(out_ref.dtype)


# ------------------------------ wrappers --------------------------------------
def pack_inputs(audio_btc, spect_btc):
    """(B,T,N_IN),(B,T,N_MEL) -> single lane-dense (B*T, 128) slab with a constant-1 lane."""
    n_rows = B * T
    slab = jnp.zeros((n_rows, LANES), jnp.float32)
    slab = slab.at[:, IN_AUDIO:IN_AUDIO + N_IN].set(audio_btc.reshape(n_rows, N_IN))
    slab = slab.at[:, IN_SPECT:IN_SPECT + N_MEL].set(spect_btc.reshape(n_rows, N_MEL))
    slab = slab.at[:, IN_ONE].set(1.0)
    return slab


def pack_wn_params(p):
    """Pack all module parameters into two weight slabs (done once, at load time).

    wtap: (L+1, 128, K*128)
      slots 0..L-1 : per-layer fused tap weights; tap k lives in lanes [k*128, k*128+2C);
                     the center tap additionally carries the cond projection (rows H_SPECT..)
                     and the fused bias in_b + cond_b (row H_ONE).
      slot  L      : lanes [0:128] = start/layout matmul S, lanes [128:256] = end/pack matmul E.
    wrs : (L, RS_ROWS, 128) res/skip weights (rows 0..C-1) + bias (row C), columns already in
          hidden-state lane coordinates (res -> [0:C], skip -> [H_SKIP:H_SKIP+C]).
    """
    c = N_CH
    c2 = 2 * c
    half = (KSIZE - 1) // 2

    wtap = jnp.zeros((N_LAYERS + 1, LANES, KSIZE * LANES), jnp.float32)
    for i in range(N_LAYERS):
        for k in range(KSIZE):
            wtap = wtap.at[i, H_AUDIO:H_AUDIO + c,
                           k * LANES:k * LANES + c2].set(p["in_w"][i, k])
        cw = p["cond_w"][:, i * c2:(i + 1) * c2]          # (N_MEL, 2C)
        cb = p["cond_b"][i * c2:(i + 1) * c2]             # (2C,)
        wtap = wtap.at[i, H_SPECT:H_SPECT + N_MEL,
                       half * LANES:half * LANES + c2].set(cw)
        wtap = wtap.at[i, H_ONE,
                       half * LANES:half * LANES + c2].set(p["in_b"][i] + cb)

    # S: start 1x1 conv + layout transform
    wtap = wtap.at[N_LAYERS, IN_AUDIO:IN_AUDIO + N_IN,
                   H_AUDIO:H_AUDIO + c].set(p["start_w"])
    wtap = wtap.at[N_LAYERS, IN_SPECT:IN_SPECT + N_MEL,
                   H_SPECT:H_SPECT + N_MEL].set(jnp.eye(N_MEL, dtype=jnp.float32))
    wtap = wtap.at[N_LAYERS, IN_ONE, H_AUDIO:H_AUDIO + c].set(p["start_b"])
    wtap = wtap.at[N_LAYERS, IN_ONE, H_ONE].set(1.0)

    # E: end 1x1 conv + lane-dense output packing  [ end | skip | 0... ]
    eo = LANES
    wtap = wtap.at[N_LAYERS, H_SKIP:H_SKIP + c,
                   eo + OUT_END:eo + OUT_END + 2 * N_IN].set(p["end_w"])
    wtap = wtap.at[N_LAYERS, H_SKIP:H_SKIP + c,
                   eo + OUT_SKIP:eo + OUT_SKIP + c].set(jnp.eye(c, dtype=jnp.float32))
    wtap = wtap.at[N_LAYERS, H_ONE, eo + OUT_END:eo + OUT_END + 2 * N_IN].set(p["end_b"])

    wrs = jnp.zeros((N_LAYERS, RS_ROWS, LANES), jnp.float32)
    for i in range(N_LAYERS):
        w = p["res_skip_w"][i]
        b = p["res_skip_b"][i]
        if i < N_LAYERS - 1:                              # res + skip
            wrs = wrs.at[i, :c, H_AUDIO:H_AUDIO + c].set(w[:, :c])
            wrs = wrs.at[i, :c, H_SKIP:H_SKIP + c].set(w[:, c:])
            wrs = wrs.at[i, c, H_AUDIO:H_AUDIO + c].set(b[:c])
            wrs = wrs.at[i, c, H_SKIP:H_SKIP + c].set(b[c:])
        else:                                             # last layer: skip only
            wrs = wrs.at[i, :c, H_SKIP:H_SKIP + c].set(w)
            wrs = wrs.at[i, c, H_SKIP:H_SKIP + c].set(b)
    return wtap, wrs


def wn_forward_pallas(audio_btc, spect_btc, wtap, wrs):
    """audio_btc: (B,T,N_IN), spect_btc: (B,T,N_MEL). Returns (end, skip) in BTC layout."""
    n_rows = B * T
    # masks never wrap within a sequence because |off| >= T contributions are fully zeroed,
    # but keep the sanity check that the toy config stays in the verified regime.
    assert (2 ** (N_LAYERS - 1)) * ((KSIZE - 1) // 2) < T

    in_slab = pack_inputs(audio_btc, spect_btc)

    kernel = functools.partial(
        wn_kernel, n_layers=N_LAYERS, n_channels=N_CH, kernel_size=KSIZE,
        seq_len=T, n_rows=n_rows)

    slab = pl.pallas_call(
        kernel,
        out_shape=jax.ShapeDtypeStruct((n_rows, LANES), jnp.float32),
        in_specs=[pl.BlockSpec(memory_space=pltpu.MemorySpace.VMEM)] * 3,
        out_specs=pl.BlockSpec(memory_space=pltpu.MemorySpace.VMEM),
    )(in_slab, wtap, wrs)

    slab = slab.reshape(B, T, LANES)
    y_end = slab[:, :, OUT_END:OUT_END + 2 * N_IN]        # (B, T, 2*N_IN)
    y_skip = slab[:, :, OUT_SKIP:OUT_SKIP + N_CH]         # (B, T, N_CH)
    return y_end, y_skip


# -------------------------- parameter construction ---------------------------
def make_params(key):
    """Random params in channels-last (contraction-first) layout.

    torch weight_norm at init has g = ||v||, so the effective weight equals v exactly; we sample
    the effective weights directly.  (When loading trained weights, compute w = g * v / (||v||+eps)
    with an epsilon to avoid NaNs on all-zero filters.)
    """
    ks = jax.random.split(key, 8)
    p = {}
    p["start_w"] = 0.2 * jax.random.normal(ks[0], (N_IN, N_CH), jnp.float32)
    p["start_b"] = 0.1 * jax.random.normal(ks[1], (N_CH,), jnp.float32)

    c2l = 2 * N_CH * N_LAYERS
    p["cond_w"] = 0.2 * jax.random.normal(ks[2], (N_MEL, c2l), jnp.float32)
    p["cond_b"] = 0.1 * jax.random.normal(ks[3], (c2l,), jnp.float32)

    p["in_w"] = 0.2 * jax.random.normal(ks[4], (N_LAYERS, KSIZE, N_CH, 2 * N_CH), jnp.float32)
    p["in_b"] = 0.1 * jax.random.normal(ks[5], (N_LAYERS, 2 * N_CH), jnp.float32)

    rw, rb = [], []
    for i in range(N_LAYERS):
        out_c = 2 * N_CH if i < N_LAYERS - 1 else N_CH    # last layer is skip-only
        rw.append(0.2 * jax.random.normal(jax.random.fold_in(ks[6], i), (N_CH, out_c), jnp.float32))
        rb.append(0.1 * jax.random.normal(jax.random.fold_in(ks[7], i), (out_c,), jnp.float32))
    p["res_skip_w"] = rw
    p["res_skip_b"] = rb

    # end conv is zero-initialised in the PyTorch module
    p["end_w"] = jnp.zeros((N_CH, 2 * N_IN), jnp.float32)
    p["end_b"] = jnp.zeros((2 * N_IN,), jnp.float32)
    return p


# ------------------------------ JAX reference --------------------------------
def wn_reference(audio_btc, spect_btc, p):
    x = jnp.einsum("btc,cd->btd", audio_btc, p["start_w"]) + p["start_b"]
    cond = jnp.einsum("btc,cd->btd", spect_btc, p["cond_w"]) + p["cond_b"]
    output = jnp.zeros((B, T, N_CH), jnp.float32)
    for i in range(N_LAYERS):
        d = 2 ** i
        pad = d * (KSIZE - 1) // 2
        xp = jnp.pad(x, ((0, 0), (pad, pad), (0, 0)))
        z = jnp.zeros((B, T, 2 * N_CH), jnp.float32)
        for k in range(KSIZE):
            z = z + jnp.einsum("btc,cd->btd", xp[:, k * d:k * d + T, :], p["in_w"][i, k])
        z = z + p["in_b"][i] + cond[:, :, i * 2 * N_CH:(i + 1) * 2 * N_CH]
        acts = jnp.tanh(z[..., :N_CH]) * jax.nn.sigmoid(z[..., N_CH:])
        rs = jnp.einsum("btc,cd->btd", acts, p["res_skip_w"][i]) + p["res_skip_b"][i]
        if i < N_LAYERS - 1:
            x = x + rs[..., :N_CH]
            output = output + rs[..., N_CH:]
        else:
            output = output + rs
    y = jnp.einsum("btc,cd->btd", output, p["end_w"]) + p["end_b"]
    return y, output


# --------------------------------- main --------------------------------------
if __name__ == "__main__":
    key = jax.random.PRNGKey(0)
    k_audio, k_spect, k_params, k_end = jax.random.split(key, 4)

    # PyTorch-style NCT inputs
    audio_nct = jax.random.normal(k_audio, (B, N_IN, T), jnp.float32)
    spect_nct = jax.random.normal(k_spect, (B, N_MEL, T), jnp.float32)
    audio_btc = jnp.transpose(audio_nct, (0, 2, 1))
    spect_btc = jnp.transpose(spect_nct, (0, 2, 1))

    # --- module-faithful params (end conv zero-initialised, as in PyTorch) ---
    params = make_params(k_params)
    wtap, wrs = pack_wn_params(params)
    y_end, y_skip = wn_forward_pallas(audio_btc, spect_btc, wtap, wrs)
    y_end = jax.block_until_ready(y_end)
    y_skip = jax.block_until_ready(y_skip)
    r_end, r_skip = wn_reference(audio_btc, spect_btc, params)
    assert jnp.allclose(y_end, r_end, atol=1e-4, rtol=1e-4)
    assert jnp.allclose(y_skip, r_skip, atol=1e-4, rtol=1e-4)

    # --- non-vacuous end-path / slab-packing test: nonzero end weights ---
    params_t = dict(params)
    params_t["end_w"] = 0.3 * jax.random.normal(k_end, (N_CH, 2 * N_IN), jnp.float32)
    params_t["end_b"] = 0.1 * jax.random.normal(jax.random.fold_in(k_end, 1), (2 * N_IN,), jnp.float32)
    wtap_t, wrs_t = pack_wn_params(params_t)
    y_end_t, y_skip_t = wn_forward_pallas(audio_btc, spect_btc, wtap_t, wrs_t)
    y_end_t = jax.block_until_ready(y_end_t)
    r_end_t, r_skip_t = wn_reference(audio_btc, spect_btc, params_t)
    assert jnp.allclose(y_end_t, r_end_t, atol=1e-4, rtol=1e-4)
    assert jnp.allclose(y_skip_t, r_skip_t, atol=1e-4, rtol=1e-4)

    # PyTorch module returns self.end(output) in NCT convention
    y_end_nct = jnp.transpose(y_end, (0, 2, 1))
    assert y_end_nct.shape == (B, 2 * N_IN, T)

    print("KERNEL_OK")
</pallas_src>

<mosaic_0001>
module attributes {stable_mosaic.version = 11 : i64} {
  func.func @wn_kernel(%arg0: memref<32x128xf32, #tpu.memory_space<vmem>>, %arg1: memref<5x128x384xf32, #tpu.memory_space<vmem>>, %arg2: memref<4x24x128xf32, #tpu.memory_space<vmem>>, %arg3: memref<32x128xf32, #tpu.memory_space<vmem>>) attributes {dimension_semantics = [], scalar_prefetch = 0 : i64, scratch_operands = 0 : i64, tpu.core_type = #tpu.core_type<tc>} {
    %c0 = arith.constant 0 : index
    %c0_0 = arith.constant 0 : index
    %0 = vector.load %arg0[%c0, %c0_0] : memref<32x128xf32, #tpu.memory_space<vmem>>, vector<32x128xf32>
    %c4 = arith.constant 4 : index
    %c0_1 = arith.constant 0 : index
    %c0_2 = arith.constant 0 : index
    %1 = vector.load %arg1[%c4, %c0_1, %c0_2] : memref<5x128x384xf32, #tpu.memory_space<vmem>>, vector<1x128x128xf32>
    %2 = vector.shape_cast %1 : vector<1x128x128xf32> to vector<128x128xf32>
    %c4_3 = arith.constant 4 : index
    %c0_4 = arith.constant 0 : index
    %c128 = arith.constant 128 : index
    %3 = vector.load %arg1[%c4_3, %c0_4, %c128] : memref<5x128x384xf32, #tpu.memory_space<vmem>>, vector<1x128x128xf32>
    %4 = vector.shape_cast %3 : vector<1x128x128xf32> to vector<128x128xf32>
    %cst = arith.constant dense<0.000000e+00> : vector<32x128xf32>
    %5 = tpu.matmul %0, %2, %cst {dimension_numbers = #tpu.dot_dimension_numbers<[1], [0], [0], [1], [0, 0, 1, 1], [], []>} : vector<32x128xf32>, vector<128x128xf32>, vector<32x128xf32> -> vector<32x128xf32>
    %6 = tpu.iota {dimensions = array<i32: 0>} : vector<32x1xi32>
    %c16_i32 = arith.constant 16 : i32
    %c0_i32 = arith.constant 0 : i32
    %7 = arith.cmpi eq, %c16_i32, %c0_i32 : i32
    %c1_i32 = arith.constant 1 : i32
    %8 = arith.select %7, %c1_i32, %c16_i32 : i32
    %9 = vector.broadcast %8 : i32 to vector<32x1xi32>
    %10 = arith.remsi %6, %9 : vector<32x1xi32>
    %c0_i32_5 = arith.constant 0 : i32
    %11 = vector.broadcast %c0_i32_5 : i32 to vector<32x1xi32>
    %12 = arith.cmpi ne, %10, %11 : vector<32x1xi32>
    %c0_i32_6 = arith.constant 0 : i32
    %13 = vector.broadcast %c0_i32_6 : i32 to vector<32x1xi32>
    %14 = arith.cmpi slt, %10, %13 : vector<32x1xi32>
    %c0_i32_7 = arith.constant 0 : i32
    %15 = arith.cmpi slt, %8, %c0_i32_7 : i32
    %16 = vector.broadcast %15 : i1 to vector<32x1xi1>
    %17 = vector.broadcast %16 : vector<32x1xi1> to vector<32x1xi1>
    %18 = arith.xori %14, %17 : vector<32x1xi1>
    %19 = arith.andi %18, %12 : vector<32x1xi1>
    %20 = vector.broadcast %8 : i32 to vector<32x1xi32>
    %21 = arith.addi %10, %20 : vector<32x1xi32>
    %22 = arith.select %19, %21, %10 : vector<32x1xi1>, vector<32x1xi32>
    %c0_8 = arith.constant 0 : index
    %c0_9 = arith.constant 0 : index
    %c0_10 = arith.constant 0 : index
    %23 = vector.load %arg1[%c0_8, %c0_9, %c0_10] : memref<5x128x384xf32, #tpu.memory_space<vmem>>, vector<1x128x384xf32>
    %24 = vector.shape_cast %23 : vector<1x128x384xf32> to vector<128x384xf32>
    %cst_11 = arith.constant dense<0.000000e+00> : vector<32x384xf32>
    %25 = tpu.matmul %5, %24, %cst_11 {dimension_numbers = #tpu.dot_dimension_numbers<[1], [0], [0], [1], [0, 0, 1, 1], [], []>} : vector<32x128xf32>, vector<128x384xf32>, vector<32x384xf32> -> vector<32x384xf32>
    %26 = vector.extract_strided_slice %25 {offsets = [0, 128], sizes = [32, 128], strides = [1, 1]} : vector<32x384xf32> to vector<32x128xf32>
    %27 = vector.extract_strided_slice %25 {offsets = [0, 0], sizes = [32, 128], strides = [1, 1]} : vector<32x384xf32> to vector<32x128xf32>
    %c1_i32_12 = arith.constant 1 : i32
    %28 = tpu.dynamic_rotate %27 by %c1_i32_12 dim 0 : vector<32x128xf32>, i32 -> vector<32x128xf32>
    %c1_i32_13 = arith.constant 1 : i32
    %29 = vector.broadcast %c1_i32_13 : i32 to vector<32x1xi32>
    %30 = arith.cmpi sge, %22, %29 : vector<32x1xi32>
    %cst_14 = arith.constant 0.000000e+00 : f32
    %31 = vector.shape_cast %30 : vector<32x1xi1> to vector<32x1xi1>
    %32 = vector.broadcast %31 : vector<32x1xi1> to vector<32x128xi1>
    %33 = vector.broadcast %cst_14 : f32 to vector<32x128xf32>
    %34 = arith.select %32, %28, %33 : vector<32x128xi1>, vector<32x128xf32>
    %35 = arith.addf %26, %34 : vector<32x128xf32>
    %36 = vector.extract_strided_slice %25 {offsets = [0, 256], sizes = [32, 128], strides = [1, 1]} : vector<32x384xf32> to vector<32x128xf32>
    %c31_i32 = arith.constant 31 : i32
    %37 = tpu.dynamic_rotate %36 by %c31_i32 dim 0 : vector<32x128xf32>, i32 -> vector<32x128xf32>
    %c15_i32 = arith.constant 15 : i32
    %38 = vector.broadcast %c15_i32 : i32 to vector<32x1xi32>
    %39 = arith.cmpi slt, %22, %38 : vector<32x1xi32>
    %cst_15 = arith.constant 0.000000e+00 : f32
    %40 = vector.shape_cast %39 : vector<32x1xi1> to vector<32x1xi1>
    %41 = vector.broadcast %40 : vector<32x1xi1> to vector<32x128xi1>
    %42 = vector.broadcast %cst_15 : f32 to vector<32x128xf32>
    %43 = arith.select %41, %37, %42 : vector<32x128xi1>, vector<32x128xf32>
    %44 = arith.addf %35, %43 : vector<32x128xf32>
    %45 = vector.extract_strided_slice %44 {offsets = [0, 0], sizes = [32, 16], strides = [1, 1]} : vector<32x128xf32> to vector<32x16xf32>
    %46 = math.tanh %45 : vector<32x16xf32>
    %47 = vector.extract_strided_slice %44 {offsets = [0, 16], sizes = [32, 16], strides = [1, 1]} : vector<32x128xf32> to vector<32x16xf32>
    %48 = arith.negf %47 : vector<32x16xf32>
    %49 = math.exp %48 : vector<32x16xf32>
    %cst_16 = arith.constant 1.000000e+00 : f32
    %50 = vector.broadcast %cst_16 : f32 to vector<32x16xf32>
    %51 = arith.addf %50, %49 : vector<32x16xf32>
    %52 = arith.divf %50, %51 : vector<32x16xf32>
    %53 = arith.mulf %46, %52 : vector<32x16xf32>
    %c0_17 = arith.constant 0 : index
    %c0_18 = arith.constant 0 : index
    %c0_19 = arith.constant 0 : index
    %54 = vector.load %arg2[%c0_17, %c0_18, %c0_19] : memref<4x24x128xf32, #tpu.memory_space<vmem>>, vector<1x16x128xf32>
    %55 = vector.shape_cast %54 : vector<1x16x128xf32> to vector<16x128xf32>
    %c0_20 = arith.constant 0 : index
    %c16 = arith.constant 16 : index
    %c0_21 = arith.constant 0 : index
    %56 = vector.load %arg2[%c0_20, %c16, %c0_21] : memref<4x24x128xf32, #tpu.memory_space<vmem>>, vector<1x1x128xf32>
    %57 = vector.shape_cast %56 : vector<1x1x128xf32> to vector<1x128xf32>
    %cst_22 = arith.constant dense<0.000000e+00> : vector<32x128xf32>
    %58 = tpu.matmul %53, %55, %cst_22 {dimension_numbers = #tpu.dot_dimension_numbers<[1], [0], [0], [1], [0, 0, 1, 1], [], []>} : vector<32x16xf32>, vector<16x128xf32>, vector<32x128xf32> -> vector<32x128xf32>
    %59 = vector.broadcast %57 : vector<1x128xf32> to vector<32x128xf32>
    %60 = arith.addf %58, %59 : vector<32x128xf32>
    %61 = arith.addf %5, %60 : vector<32x128xf32>
    %c1 = arith.constant 1 : index
    %c0_23 = arith.constant 0 : index
    %c0_24 = arith.constant 0 : index
    %62 = vector.load %arg1[%c1, %c0_23, %c0_24] : memref<5x128x384xf32, #tpu.memory_space<vmem>>, vector<1x128x384xf32>
    %63 = vector.shape_cast %62 : vector<1x128x384xf32> to vector<128x384xf32>
    %cst_25 = arith.constant dense<0.000000e+00> : vector<32x384xf32>
    %64 = tpu.matmul %61, %63, %cst_25 {dimension_numbers = #tpu.dot_dimension_numbers<[1], [0], [0], [1], [0, 0, 1, 1], [], []>} : vector<32x128xf32>, vector<128x384xf32>, vector<32x384xf32> -> vector<32x384xf32>
    %65 = vector.extract_strided_slice %64 {offsets = [0, 128], sizes = [32, 128], strides = [1, 1]} : vector<32x384xf32> to vector<32x128xf32>
    %66 = vector.extract_strided_slice %64 {offsets = [0, 0], sizes = [32, 128], strides = [1, 1]} : vector<32x384xf32> to vector<32x128xf32>
    %c2_i32 = arith.constant 2 : i32
    %67 = tpu.dynamic_rotate %66 by %c2_i32 dim 0 : vector<32x128xf32>, i32 -> vector<32x128xf32>
    %c2_i32_26 = arith.constant 2 : i32
    %68 = vector.broadcast %c2_i32_26 : i32 to vector<32x1xi32>
    %69 = arith.cmpi sge, %22, %68 : vector<32x1xi32>
    %cst_27 = arith.constant 0.000000e+00 : f32
    %70 = vector.shape_cast %69 : vector<32x1xi1> to vector<32x1xi1>
    %71 = vector.broadcast %70 : vector<32x1xi1> to vector<32x128xi1>
    %72 = vector.broadcast %cst_27 : f32 to vector<32x128xf32>
    %73 = arith.select %71, %67, %72 : vector<32x128xi1>, vector<32x128xf32>
    %74 = arith.addf %65, %73 : vector<32x128xf32>
    %75 = vector.extract_strided_slice %64 {offsets = [0, 256], sizes = [32, 128], strides = [1, 1]} : vector<32x384xf32> to vector<32x128xf32>
    %c30_i32 = arith.constant 30 : i32
    %76 = tpu.dynamic_rotate %75 by %c30_i32 dim 0 : vector<32x128xf32>, i32 -> vector<32x128xf32>
    %c14_i32 = arith.constant 14 : i32
    %77 = vector.broadcast %c14_i32 : i32 to vector<32x1xi32>
    %78 = arith.cmpi slt, %22, %77 : vector<32x1xi32>
    %cst_28 = arith.constant 0.000000e+00 : f32
    %79 = vector.shape_cast %78 : vector<32x1xi1> to vector<32x1xi1>
    %80 = vector.broadcast %79 : vector<32x1xi1> to vector<32x128xi1>
    %81 = vector.broadcast %cst_28 : f32 to vector<32x128xf32>
    %82 = arith.select %80, %76, %81 : vector<32x128xi1>, vector<32x128xf32>
    %83 = arith.addf %74, %82 : vector<32x128xf32>
    %84 = vector.extract_strided_slice %83 {offsets = [0, 0], sizes = [32, 16], strides = [1, 1]} : vector<32x128xf32> to vector<32x16xf32>
    %85 = math.tanh %84 : vector<32x16xf32>
    %86 = vector.extract_strided_slice %83 {offsets = [0, 16], sizes = [32, 16], strides = [1, 1]} : vector<32x128xf32> to vector<32x16xf32>
    %87 = arith.negf %86 : vector<32x16xf32>
    %88 = math.exp %87 : vector<32x16xf32>
    %cst_29 = arith.constant 1.000000e+00 : f32
    %89 = vector.broadcast %cst_29 : f32 to vector<32x16xf32>
    %90 = arith.addf %89, %88 : vector<32x16xf32>
    %91 = arith.divf %89, %90 : vector<32x16xf32>
    %92 = arith.mulf %85, %91 : vector<32x16xf32>
    %c1_30 = arith.constant 1 : index
    %c0_31 = arith.constant 0 : index
    %c0_32 = arith.constant 0 : index
    %93 = vector.load %arg2[%c1_30, %c0_31, %c0_32] : memref<4x24x128xf32, #tpu.memory_space<vmem>>, vector<1x16x128xf32>
    %94 = vector.shape_cast %93 : vector<1x16x128xf32> to vector<16x128xf32>
    %c1_33 = arith.constant 1 : index
    %c16_34 = arith.constant 16 : index
    %c0_35 = arith.constant 0 : index
    %95 = vector.load %arg2[%c1_33, %c16_34, %c0_35] : memref<4x24x128xf32, #tpu.memory_space<vmem>>, vector<1x1x128xf32>
    %96 = vector.shape_cast %95 : vector<1x1x128xf32> to vector<1x128xf32>
    %cst_36 = arith.constant dense<0.000000e+00> : vector<32x128xf32>
    %97 = tpu.matmul %92, %94, %cst_36 {dimension_numbers = #tpu.dot_dimension_numbers<[1], [0], [0], [1], [0, 0, 1, 1], [], []>} : vector<32x16xf32>, vector<16x128xf32>, vector<32x128xf32> -> vector<32x128xf32>
    %98 = vector.broadcast %96 : vector<1x128xf32> to vector<32x128xf32>
    %99 = arith.addf %97, %98 : vector<32x128xf32>
    %100 = arith.addf %61, %99 : vector<32x128xf32>
    %c2 = arith.constant 2 : index
    %c0_37 = arith.constant 0 : index
    %c0_38 = arith.constant 0 : index
    %101 = vector.load %arg1[%c2, %c0_37, %c0_38] : memref<5x128x384xf32, #tpu.memory_space<vmem>>, vector<1x128x384xf32>
    %102 = vector.shape_cast %101 : vector<1x128x384xf32> to vector<128x384xf32>
    %cst_39 = arith.constant dense<0.000000e+00> : vector<32x384xf32>
    %103 = tpu.matmul %100, %102, %cst_39 {dimension_numbers = #tpu.dot_dimension_numbers<[1], [0], [0], [1], [0, 0, 1, 1], [], []>} : vector<32x128xf32>, vector<128x384xf32>, vector<32x384xf32> -> vector<32x384xf32>
    %104 = vector.extract_strided_slice %103 {offsets = [0, 128], sizes = [32, 128], strides = [1, 1]} : vector<32x384xf32> to vector<32x128xf32>
    %105 = vector.extract_strided_slice %103 {offsets = [0, 0], sizes = [32, 128], strides = [1, 1]} : vector<32x384xf32> to vector<32x128xf32>
    %c4_i32 = arith.constant 4 : i32
    %106 = tpu.dynamic_rotate %105 by %c4_i32 dim 0 : vector<32x128xf32>, i32 -> vector<32x128xf32>
    %c4_i32_40 = arith.constant 4 : i32
    %107 = vector.broadcast %c4_i32_40 : i32 to vector<32x1xi32>
    %108 = arith.cmpi sge, %22, %107 : vector<32x1xi32>
    %cst_41 = arith.constant 0.000000e+00 : f32
    %109 = vector.shape_cast %108 : vector<32x1xi1> to vector<32x1xi1>
    %110 = vector.broadcast %109 : vector<32x1xi1> to vector<32x128xi1>
    %111 = vector.broadcast %cst_41 : f32 to vector<32x128xf32>
    %112 = arith.select %110, %106, %111 : vector<32x128xi1>, vector<32x128xf32>
    %113 = arith.addf %104, %112 : vector<32x128xf32>
    %114 = vector.extract_strided_slice %103 {offsets = [0, 256], sizes = [32, 128], strides = [1, 1]} : vector<32x384xf32> to vector<32x128xf32>
    %c28_i32 = arith.constant 28 : i32
    %115 = tpu.dynamic_rotate %114 by %c28_i32 dim 0 : vector<32x128xf32>, i32 -> vector<32x128xf32>
    %c12_i32 = arith.constant 12 : i32
    %116 = vector.broadcast %c12_i32 : i32 to vector<32x1xi32>
    %117 = arith.cmpi slt, %22, %116 : vector<32x1xi32>
    %cst_42 = arith.constant 0.000000e+00 : f32
    %118 = vector.shape_cast %117 : vector<32x1xi1> to vector<32x1xi1>
    %119 = vector.broadcast %118 : vector<32x1xi1> to vector<32x128xi1>
    %120 = vector.broadcast %cst_42 : f32 to vector<32x128xf32>
    %121 = arith.select %119, %115, %120 : vector<32x128xi1>, vector<32x128xf32>
    %122 = arith.addf %113, %121 : vector<32x128xf32>
    %123 = vector.extract_strided_slice %122 {offsets = [0, 0], sizes = [32, 16], strides = [1, 1]} : vector<32x128xf32> to vector<32x16xf32>
    %124 = math.tanh %123 : vector<32x16xf32>
    %125 = vector.extract_strided_slice %122 {offsets = [0, 16], sizes = [32, 16], strides = [1, 1]} : vector<32x128xf32> to vector<32x16xf32>
    %126 = arith.negf %125 : vector<32x16xf32>
    %127 = math.exp %126 : vector<32x16xf32>
    %cst_43 = arith.constant 1.000000e+00 : f32
    %128 = vector.broadcast %cst_43 : f32 to vector<32x16xf32>
    %129 = arith.addf %128, %127 : vector<32x16xf32>
    %130 = arith.divf %128, %129 : vector<32x16xf32>
    %131 = arith.mulf %124, %130 : vector<32x16xf32>
    %c2_44 = arith.constant 2 : index
    %c0_45 = arith.constant 0 : index
    %c0_46 = arith.constant 0 : index
    %132 = vector.load %arg2[%c2_44, %c0_45, %c0_46] : memref<4x24x128xf32, #tpu.memory_space<vmem>>, vector<1x16x128xf32>
    %133 = vector.shape_cast %132 : vector<1x16x128xf32> to vector<16x128xf32>
    %c2_47 = arith.constant 2 : index
    %c16_48 = arith.constant 16 : index
    %c0_49 = arith.constant 0 : index
    %134 = vector.load %arg2[%c2_47, %c16_48, %c0_49] : memref<4x24x128xf32, #tpu.memory_space<vmem>>, vector<1x1x128xf32>
    %135 = vector.shape_cast %134 : vector<1x1x128xf32> to vector<1x128xf32>
    %cst_50 = arith.constant dense<0.000000e+00> : vector<32x128xf32>
    %136 = tpu.matmul %131, %133, %cst_50 {dimension_numbers = #tpu.dot_dimension_numbers<[1], [0], [0], [1], [0, 0, 1, 1], [], []>} : vector<32x16xf32>, vector<16x128xf32>, vector<32x128xf32> -> vector<32x128xf32>
    %137 = vector.broadcast %135 : vector<1x128xf32> to vector<32x128xf32>
    %138 = arith.addf %136, %137 : vector<32x128xf32>
    %139 = arith.addf %100, %138 : vector<32x128xf32>
    %c3 = arith.constant 3 : index
    %c0_51 = arith.constant 0 : index
    %c0_52 = arith.constant 0 : index
    %140 = vector.load %arg1[%c3, %c0_51, %c0_52] : memref<5x128x384xf32, #tpu.memory_space<vmem>>, vector<1x128x384xf32>
    %141 = vector.shape_cast %140 : vector<1x128x384xf32> to vector<128x384xf32>
    %cst_53 = arith.constant dense<0.000000e+00> : vector<32x384xf32>
    %142 = tpu.matmul %139, %141, %cst_53 {dimension_numbers = #tpu.dot_dimension_numbers<[1], [0], [0], [1], [0, 0, 1, 1], [], []>} : vector<32x128xf32>, vector<128x384xf32>, vector<32x384xf32> -> vector<32x384xf32>
    %143 = vector.extract_strided_slice %142 {offsets = [0, 128], sizes = [32, 128], strides = [1, 1]} : vector<32x384xf32> to vector<32x128xf32>
    %144 = vector.extract_strided_slice %142 {offsets = [0, 0], sizes = [32, 128], strides = [1, 1]} : vector<32x384xf32> to vector<32x128xf32>
    %c8_i32 = arith.constant 8 : i32
    %145 = tpu.dynamic_rotate %144 by %c8_i32 dim 0 : vector<32x128xf32>, i32 -> vector<32x128xf32>
    %c8_i32_54 = arith.constant 8 : i32
    %146 = vector.broadcast %c8_i32_54 : i32 to vector<32x1xi32>
    %147 = arith.cmpi sge, %22, %146 : vector<32x1xi32>
    %cst_55 = arith.constant 0.000000e+00 : f32
    %148 = vector.shape_cast %147 : vector<32x1xi1> to vector<32x1xi1>
    %149 = vector.broadcast %148 : vector<32x1xi1> to vector<32x128xi1>
    %150 = vector.broadcast %cst_55 : f32 to vector<32x128xf32>
    %151 = arith.select %149, %145, %150 : vector<32x128xi1>, vector<32x128xf32>
    %152 = arith.addf %143, %151 : vector<32x128xf32>
    %153 = vector.extract_strided_slice %142 {offsets = [0, 256], sizes = [32, 128], strides = [1, 1]} : vector<32x384xf32> to vector<32x128xf32>
    %c24_i32 = arith.constant 24 : i32
    %154 = tpu.dynamic_rotate %153 by %c24_i32 dim 0 : vector<32x128xf32>, i32 -> vector<32x128xf32>
    %c8_i32_56 = arith.constant 8 : i32
    %155 = vector.broadcast %c8_i32_56 : i32 to vector<32x1xi32>
    %156 = arith.cmpi slt, %22, %155 : vector<32x1xi32>
    %cst_57 = arith.constant 0.000000e+00 : f32
    %157 = vector.shape_cast %156 : vector<32x1xi1> to vector<32x1xi1>
    %158 = vector.broadcast %157 : vector<32x1xi1> to vector<32x128xi1>
    %159 = vector.broadcast %cst_57 : f32 to vector<32x128xf32>
    %160 = arith.select %158, %154, %159 : vector<32x128xi1>, vector<32x128xf32>
    %161 = arith.addf %152, %160 : vector<32x128xf32>
    %162 = vector.extract_strided_slice %161 {offsets = [0, 0], sizes = [32, 16], strides = [1, 1]} : vector<32x128xf32> to vector<32x16xf32>
    %163 = math.tanh %162 : vector<32x16xf32>
    %164 = vector.extract_strided_slice %161 {offsets = [0, 16], sizes = [32, 16], strides = [1, 1]} : vector<32x128xf32> to vector<32x16xf32>
    %165 = arith.negf %164 : vector<32x16xf32>
    %166 = math.exp %165 : vector<32x16xf32>
    %cst_58 = arith.constant 1.000000e+00 : f32
    %167 = vector.broadcast %cst_58 : f32 to vector<32x16xf32>
    %168 = arith.addf %167, %166 : vector<32x16xf32>
    %169 = arith.divf %167, %168 : vector<32x16xf32>
    %170 = arith.mulf %163, %169 : vector<32x16xf32>
    %c3_59 = arith.constant 3 : index
    %c0_60 = arith.constant 0 : index
    %c0_61 = arith.constant 0 : index
    %171 = vector.load %arg2[%c3_59, %c0_60, %c0_61] : memref<4x24x128xf32, #tpu.memory_space<vmem>>, vector<1x16x128xf32>
    %172 = vector.shape_cast %171 : vector<1x16x128xf32> to vector<16x128xf32>
    %c3_62 = arith.constant 3 : index
    %c16_63 = arith.constant 16 : index
    %c0_64 = arith.constant 0 : index
    %173 = vector.load %arg2[%c3_62, %c16_63, %c0_64] : memref<4x24x128xf32, #tpu.memory_space<vmem>>, vector<1x1x128xf32>
    %174 = vector.shape_cast %173 : vector<1x1x128xf32> to vector<1x128xf32>
    %cst_65 = arith.constant dense<0.000000e+00> : vector<32x128xf32>
    %175 = tpu.matmul %170, %172, %cst_65 {dimension_numbers = #tpu.dot_dimension_numbers<[1], [0], [0], [1], [0, 0, 1, 1], [], []>} : vector<32x16xf32>, vector<16x128xf32>, vector<32x128xf32> -> vector<32x128xf32>
    %176 = vector.broadcast %174 : vector<1x128xf32> to vector<32x128xf32>
    %177 = arith.addf %175, %176 : vector<32x128xf32>
    %178 = arith.addf %139, %177 : vector<32x128xf32>
    %cst_66 = arith.constant dense<0.000000e+00> : vector<32x128xf32>
    %179 = tpu.matmul %178, %4, %cst_66 {dimension_numbers = #tpu.dot_dimension_numbers<[1], [0], [0], [1], [0, 0, 1, 1], [], []>} : vector<32x128xf32>, vector<128x128xf32>, vector<32x128xf32> -> vector<32x128xf32>
    %c0_67 = arith.constant 0 : index
    %c0_68 = arith.constant 0 : index
    %180 = vector.load %arg3[%c0_67, %c0_68] : memref<32x128xf32, #tpu.memory_space<vmem>>, vector<32x128xf32>
    tpu.vector_store %arg3[%c0_67, %c0_68], %179 {strides = array<i32>} : memref<32x128xf32, #tpu.memory_space<vmem>>, vector<32x128xf32>,
    return
  }
}

</mosaic_0001>

<llo_original>
// kernel: tpu_custom_call.1
$region0: #{tpu_custom_call.1}
  #allocation0 [shape = 'u32[]', space=smem, size = 0x4, offset = 0x4, fixed_abs, tag = 'smem constant byte address 0x4 - core index']
  #allocation1 [shape = 'u32[144,128]{1,0:T(1,128)}', space=vmem, size = 0x12000, scoped, tag = 'internal scratch']
  %s0 = inlined_call_operand.hbm [shape: f32[32,128], index: 0, kind: input, shape index: {}]
  %s1 = inlined_call_operand.hbm [shape: f32[5,128,384], index: 1, kind: input, shape index: {}]
  %s2 = inlined_call_operand.hbm [shape: f32[4,24,128], index: 2, kind: input, shape index: {}]
  %s3 = inlined_call_operand.hbm [shape: f32[32,128], index: 3, kind: output, shape index: {}]
  %s4 = sld [smem:[#allocation0]]
  $region34: #{tpu_custom_call.1} parent=0
    _
  %s6 = ssub.s32 1, %s4
  %s7 = scalar_select 0, %s6, %s4
  $region1: #{tpu_custom_call.1} parent=0
    #allocation2 [shape = 'u8[16384]{0}', space=vmem, size = 0x4000, scoped, tag = 'input window, operand 0, single buffered']
    #allocation3 [shape = 's32[1]{0}', space=sflag, size = 0x4, scoped, tag = 'scoped memory for tpu_custom_call.1']
    #allocation4 [shape = 's32[1]{0}', space=sflag, size = 0x4, scoped, tag = 'scoped memory for tpu_custom_call.1']
    #allocation5 [shape = 'u8[983040]{0}', space=vmem, size = 0xf0000, scoped, tag = 'input window, operand 1, single buffered']
    #allocation6 [shape = 's32[1]{0}', space=sflag, size = 0x4, scoped, tag = 'scoped memory for tpu_custom_call.1']
    #allocation7 [shape = 'u8[49152]{0}', space=vmem, size = 0xc000, scoped, tag = 'input window, operand 2, single buffered']
    #allocation8 [shape = 'u8[16384]{0}', space=vmem, size = 0x4000, scoped, tag = 'output window, operand 0, single buffered']
    %8 = vsyncpa [#allocation3], 0
    %9 = vsyncpa [#allocation6], 0
    %10 = vsyncpa [#allocation4], 0
    // Predicated region
    $region2: #{tpu_custom_call.1} parent=1 // pred_check
      _
    $region3: #{tpu_custom_call.1} parent=1 // pred_check_branch
      %12 = sbr.rel (0) target = $region5
    $region4: #{tpu_custom_call.1} parent=1 // pred_region
      %s14 = ssub.s32 512, 512
      %15 = vsyncadd [#allocation3], %s14
      %s16 = sshll.u32 [#allocation2], 4
      %s17 = int_to_ptr.vmem [resolvable:$true] %s16
      %22 = dma.hbm_to_vmem [thread:$0]  %s0, 512, %s17, [#allocation3], 128, 128, 8
    $region5: #{tpu_custom_call.1} parent=1 // pred_fallthru
      _
    // Predicated region
    $region6: #{tpu_custom_call.1} parent=1 // pred_check
      _
    $region7: #{tpu_custom_call.1} parent=1 // pred_check_branch
      %24 = sbr.rel (0) target = $region9
    $region8: #{tpu_custom_call.1} parent=1 // pred_region
      %s26 = ssub.s32 30720, 30720
      %27 = vsyncadd [#allocation6], %s26
      %s28 = sshll.u32 [#allocation5], 4
      %s29 = int_to_ptr.vmem [resolvable:$true] %s28
      %34 = dma.hbm_to_vmem [thread:$0]  %s1, 30720, %s29, [#allocation6], 384, 384, 24
    $region9: #{tpu_custom_call.1} parent=1 // pred_fallthru
      _
    // Predicated region
    $region10: #{tpu_custom_call.1} parent=1 // pred_check
      _
    $region11: #{tpu_custom_call.1} parent=1 // pred_check_branch
      %36 = sbr.rel (0) target = $region13
    $region12: #{tpu_custom_call.1} parent=1 // pred_region
      %s38 = ssub.s32 1536, 1536
      %39 = vsyncadd [#allocation6], %s38
      %s40 = sshll.u32 [#allocation7], 4
      %s41 = int_to_ptr.vmem [resolvable:$true] %s40
      %46 = dma.hbm_to_vmem [thread:$0]  %s2, 1536, %s41, [#allocation6], 128, 128, 8
    $region13: #{tpu_custom_call.1} parent=1 // pred_fallthru
      _
    // Predicated region
    $region14: #{tpu_custom_call.1} parent=1 // pred_check
      _
    $region15: #{tpu_custom_call.1} parent=1 // pred_check_branch
      %48 = sbr.rel (0) target = $region17
    $region16: #{tpu_custom_call.1} parent=1 // pred_region
      %49 = dma.done [#allocation3], 512
    $region17: #{tpu_custom_call.1} parent=1 // pred_fallthru
      _
    // Predicated region
    $region18: #{tpu_custom_call.1} parent=1 // pred_check
      _
    $region19: #{tpu_custom_call.1} parent=1 // pred_check_branch
      %51 = sbr.rel (0) target = $region21
    $region20: #{tpu_custom_call.1} parent=1 // pred_region
      %52 = dma.done [#allocation6], 30720
    $region21: #{tpu_custom_call.1} parent=1 // pred_fallthru
      _
    // Predicated region
    $region22: #{tpu_custom_call.1} parent=1 // pred_check
      _
    $region23: #{tpu_custom_call.1} parent=1 // pred_check_branch
      %54 = sbr.rel (0) target = $region25
    $region24: #{tpu_custom_call.1} parent=1 // pred_region
      %55 = dma.done [#allocation6], 1536
    $region25: #{tpu_custom_call.1} parent=1 // pred_fallthru
      _
    %v56 = vld [vmem:[#allocation2] sm:$0xff]
    %v57 = vld [vmem:[#allocation2 + $0x8] sm:$0xff]
    %v58 = vld [vmem:[#allocation2 + $0x10] sm:$0xff]
    %v59 = vld [vmem:[#allocation2 + $0x18] sm:$0xff]
    %s60 = scalar_lea.vmem [#allocation5], 1536
    %v61 = vld [vmem:[%s60] sm:$0xff]
    %v62 = vld [vmem:[%s60 + $0x18] sm:$0xff]
    %v63 = vld [vmem:[%s60 + $0x30] sm:$0xff]
    %v64 = vld [vmem:[%s60 + $0x48] sm:$0xff]
    %v65 = vld [vmem:[%s60 + $0x60] sm:$0xff]
    %v66 = vld [vmem:[%s60 + $0x78] sm:$0xff]
    %v67 = vld [vmem:[%s60 + $0x90] sm:$0xff]
    %v68 = vld [vmem:[%s60 + $0xa8] sm:$0xff]
    %v69 = vld [vmem:[%s60 + $0xc0] sm:$0xff]
    %v70 = vld [vmem:[%s60 + $0xd8] sm:$0xff]
    %v71 = vld [vmem:[%s60 + $0xf0] sm:$0xff]
    %v72 = vld [vmem:[%s60 + $0x108] sm:$0xff]
    %v73 = vld [vmem:[%s60 + $0x120] sm:$0xff]
    %v74 = vld [vmem:[%s60 + $0x138] sm:$0xff]
    %v75 = vld [vmem:[%s60 + $0x150] sm:$0xff]
    %v76 = vld [vmem:[%s60 + $0x168] sm:$0xff]
    %v77 = vld [vmem:[%s60 + $0x8] sm:$0xff]
    %v78 = vld [vmem:[%s60 + $0x20] sm:$0xff]
    %v79 = vld [vmem:[%s60 + $0x38] sm:$0xff]
    %v80 = vld [vmem:[%s60 + $0x50] sm:$0xff]
    %v81 = vld [vmem:[%s60 + $0x68] sm:$0xff]
    %v82 = vld [vmem:[%s60 + $0x80] sm:$0xff]
    %v83 = vld [vmem:[%s60 + $0x98] sm:$0xff]
    %v84 = vld [vmem:[%s60 + $0xb0] sm:$0xff]
    %v85 = vld [vmem:[%s60 + $0xc8] sm:$0xff]
    %v86 = vld [vmem:[%s60 + $0xe0] sm:$0xff]
    %v87 = vld [vmem:[%s60 + $0xf8] sm:$0xff]
    %v88 = vld [vmem:[%s60 + $0x110] sm:$0xff]
    %v89 = vld [vmem:[%s60 + $0x128] sm:$0xff]
    %v90 = vld [vmem:[%s60 + $0x140] sm:$0xff]
    %v91 = vld [vmem:[%s60 + $0x158] sm:$0xff]
    %v92 = vld [vmem:[%s60 + $0x170] sm:$0xff]
    %93 = vmatprep.subr.mxu0 0.0
    %94 = vmatpush1.msra.mxu0 %v61
    %95 = vmatprep.subr.mxu0 0.0
    %96 = vmatpush1.msra.mxu0 %v62
    %97 = vmatprep.subr.mxu0 0.0
    %98 = vmatpush1.msra.mxu0 %v63
    %99 = vmatprep.subr.mxu0 0.0
    %100 = vmatpush1.msra.mxu0 %v64
    %101 = vmatprep.subr.mxu0 0.0
    %102 = vmatpush1.msra.mxu0 %v65
    %103 = vmatprep.subr.mxu0 0.0
    %104 = vmatpush1.msra.mxu0 %v66
    %105 = vmatprep.subr.mxu0 0.0
    %106 = vmatpush1.msra.mxu0 %v67
    %107 = vmatprep.subr.mxu0 0.0
    %108 = vmatpush1.msra.mxu0 %v68
    %109 = vmatprep.subr.mxu0 0.0
    %110 = vmatpush1.msra.mxu0 %v69
    %111 = vmatprep.subr.mxu0 0.0
    %112 = vmatpush1.msra.mxu0 %v70
    %113 = vmatprep.subr.mxu0 0.0
    %114 = vmatpush1.msra.mxu0 %v71
    %115 = vmatprep.subr.mxu0 0.0
    %116 = vmatpush1.msra.mxu0 %v72
    %117 = vmatprep.subr.mxu0 0.0
    %118 = vmatpush1.msra.mxu0 %v73
    %119 = vmatprep.subr.mxu0 0.0
    %120 = vmatpush1.msra.mxu0 %v74
    %121 = vmatprep.subr.mxu0 0.0
    %122 = vmatpush1.msra.mxu0 %v75
    %123 = vmatprep.subr.mxu0 0.0
    %124 = vmatpush1.msra.mxu0 %v76
    %125 = vmatprep.subr.mxu0 0.0
    %126 = vmatpush1.msra.mxu0 0.0
    %127 = vmatprep.subr.mxu0 0.0
    %128 = vmatpush1.msra.mxu0 0.0
    %129 = vmatprep.subr.mxu0 0.0
    %130 = vmatpush1.msra.mxu0 0.0
    %131 = vmatprep.subr.mxu0 0.0
    %132 = vmatpush1.msra.mxu0 0.0
    %133 = vmatprep.subr.mxu0 0.0
    %134 = vmatpush1.msra.mxu0 0.0
    %135 = vmatprep.subr.mxu0 0.0
    %136 = vmatpush1.msra.mxu0 0.0
    %137 = vmatprep.subr.mxu0 0.0
    %138 = vmatpush1.msra.mxu0 0.0
    %139 = vmatprep.subr.mxu0 0.0
    %140 = vmatpush1.msra.mxu0 0.0
    %141 = vmatprep.subr.mxu0 0.0
    %142 = vmatpush1.msra.mxu0 0.0
    %143 = vmatprep.subr.mxu0 0.0
    %144 = vmatpush1.msra.mxu0 0.0
    %145 = vmatprep.subr.mxu0 0.0
    %146 = vmatpush1.msra.mxu0 0.0
    %147 = vmatprep.subr.mxu0 0.0
    %148 = vmatpush1.msra.mxu0 0.0
    %149 = vmatprep.subr.mxu0 0.0
    %150 = vmatpush1.msra.mxu0 0.0
    %151 = vmatprep.subr.mxu0 0.0
    %152 = vmatpush1.msra.mxu0 0.0
    %153 = vmatprep.subr.mxu0 0.0
    %154 = vmatpush1.msra.mxu0 0.0
    %155 = vmatprep.subr.mxu0 0.0
    %156 = vmatpush1.msra.mxu0 0.0
    %157 = vmatprep.mubr.f32.mxu0 0.0
    %158 = vmatmul.mubr.f32.gmra.mrb[0].mxu0 %v56
    %v159 = vpop.f32.mrb[0].mxu0
    %v160 = vadd.f32 0.0, %v159
    %v161 = vpop.f32.mrb[0].mxu0
    %162 = vmatprep.mubr.f32.mxu0 0.0
    %163 = vmatmul.mubr.f32.gmra.mrb[0].mxu0 %v57
    %v164 = vpop.f32.mrb[0].mxu0
    %v165 = vadd.f32 0.0, %v164
    %v166 = vpop.f32.mrb[0].mxu0
    %167 = vmatprep.mubr.f32.mxu0 0.0
    %168 = vmatmul.mubr.f32.gmra.mrb[0].mxu0 %v58
    %v169 = vpop.f32.mrb[0].mxu0
    %v170 = vadd.f32 0.0, %v169
    %v171 = vpop.f32.mrb[0].mxu0
    %172 = vmatprep.mubr.f32.mxu0 0.0
    %173 = vmatmul.mubr.f32.gmra.mrb[0].mxu0 %v59
    %v174 = vpop.f32.mrb[0].mxu0
    %v175 = vadd.f32 0.0, %v174
    %v176 = vpop.f32.mrb[0].mxu0
    %177 = vdwg.mxu0
    %v178 = vlaneseq
    %v179 = vshrl.u32 %v178, 7
    %v180 = vadd.s32 %v179, 8
    %v181 = vadd.s32 %v179, 16
    %v182 = vadd.s32 %v179, 24
    %vm183 = vcmp.lt.s32.totalorder %v179, 0
    %v184 = vsub.s32 0, %v179
    %v185 = vsel %vm183, %v184, %v179
    %v186 = vshrl.u32 %v185, 4
    %v187 = vand.u32 %v185, 15
    %v188 = vsub.s32 0, %v187
    %v189 = vsel %vm183, %v188, %v187
    %vm190 = vcmp.lt.s32.totalorder %v180, 0
    %v191 = vsub.s32 0, %v180
    %v192 = vsel %vm190, %v191, %v180
    %v193 = vshrl.u32 %v192, 4
    %v194 = vand.u32 %v192, 15
    %v195 = vsub.s32 0, %v194
    %v196 = vsel %vm190, %v195, %v194
    %vm197 = vcmp.lt.s32.totalorder %v181, 0
    %v198 = vsub.s32 0, %v181
    %v199 = vsel %vm197, %v198, %v181
    %v200 = vshrl.u32 %v199, 4
    %v201 = vand.u32 %v199, 15
    %v202 = vsub.s32 0, %v201
    %v203 = vsel %vm197, %v202, %v201
    %vm204 = vcmp.lt.s32.totalorder %v182, 0
    %v205 = vsub.s32 0, %v182
    %v206 = vsel %vm204, %v205, %v182
    %v207 = vshrl.u32 %v206, 4
    %v208 = vand.u32 %v206, 15
    %v209 = vsub.s32 0, %v208
    %v210 = vsel %vm204, %v209, %v208
    %vm211 = vcmp.ne.s32.totalorder %v189, 0
    %vm212 = vcmp.ne.s32.totalorder %v196, 0
    %vm213 = vcmp.ne.s32.totalorder %v203, 0
    %vm214 = vcmp.ne.s32.totalorder %v210, 0
    %vm215 = vcmp.lt.s32.totalorder %v189, 0
    %vm216 = vcmp.lt.s32.totalorder %v196, 0
    %vm217 = vcmp.lt.s32.totalorder %v203, 0
    %vm218 = vcmp.lt.s32.totalorder %v210, 0
    %vm219 = vmand %vm215, %vm211
    %vm220 = vmand %vm216, %vm212
    %vm221 = vmand %vm217, %vm213
    %vm222 = vmand %vm218, %vm214
    %v223 = vadd.s32 %v189, 16
    %v224 = vadd.s32 %v196, 16
    %v225 = vadd.s32 %v203, 16
    %v226 = vadd.s32 %v210, 16
    %v227 = vsel %vm219, %v223, %v189
    %v228 = vsel %vm220, %v224, %v196
    %v229 = vsel %vm221, %v225, %v203
    %v230 = vsel %vm222, %v226, %v210
    %v231 = vld [vmem:[#allocation5] sm:$0xff]
    %v232 = vld [vmem:[#allocation5 + $0x8] sm:$0xff]
    %v233 = vld [vmem:[#allocation5 + $0x10] sm:$0xff]
    %v234 = vld [vmem:[#allocation5 + $0x18] sm:$0xff]
    %v235 = vld [vmem:[#allocation5 + $0x20] sm:$0xff]
    %v236 = vld [vmem:[#allocation5 + $0x28] sm:$0xff]
    %v237 = vld [vmem:[#allocation5 + $0x30] sm:$0xff]
    %v238 = vld [vmem:[#allocation5 + $0x38] sm:$0xff]
    %v239 = vld [vmem:[#allocation5 + $0x40] sm:$0xff]
    %v240 = vld [vmem:[#allocation5 + $0x48] sm:$0xff]
    %v241 = vld [vmem:[#allocation5 + $0x50] sm:$0xff]
    %v242 = vld [vmem:[#allocation5 + $0x58] sm:$0xff]
    %v243 = vld [vmem:[#allocation5 + $0x60] sm:$0xff]
    %v244 = vld [vmem:[#allocation5 + $0x68] sm:$0xff]
    %v245 = vld [vmem:[#allocation5 + $0x70] sm:$0xff]
    %v246 = vld [vmem:[#allocation5 + $0x78] sm:$0xff]
    %v247 = vld [vmem:[#allocation5 + $0x80] sm:$0xff]
    %v248 = vld [vmem:[#allocation5 + $0x88] sm:$0xff]
    %v249 = vld [vmem:[#allocation5 + $0x90] sm:$0xff]
    %v250 = vld [vmem:[#allocation5 + $0x98] sm:$0xff]
    %v251 = vld [vmem:[#allocation5 + $0xa0] sm:$0xff]
    %v252 = vld [vmem:[#allocation5 + $0xa8] sm:$0xff]
    %v253 = vld [vmem:[#allocation5 + $0xb0] sm:$0xff]
    %v254 = vld [vmem:[#allocation5 + $0xb8] sm:$0xff]
    %v255 = vld [vmem:[#allocation5 + $0xc0] sm:$0xff]
    %v256 = vld [vmem:[#allocation5 + $0xc8] sm:$0xff]
    %v257 = vld [vmem:[#allocation5 + $0xd0] sm:$0xff]
    %v258 = vld [vmem:[#allocation5 + $0xd8] sm:$0xff]
    %v259 = vld [vmem:[#allocation5 + $0xe0] sm:$0xff]
    %v260 = vld [vmem:[#allocation5 + $0xe8] sm:$0xff]
    %v261 = vld [vmem:[#allocation5 + $0xf0] sm:$0xff]
    %v262 = vld [vmem:[#allocation5 + $0xf8] sm:$0xff]
    %v263 = vld [vmem:[#allocation5 + $0x100] sm:$0xff]
    %v264 = vld [vmem:[#allocation5 + $0x108] sm:$0xff]
    %v265 = vld [vmem:[#allocation5 + $0x110] sm:$0xff]
    %v266 = vld [vmem:[#allocation5 + $0x118] sm:$0xff]
    %v267 = vld [vmem:[#allocation5 + $0x120] sm:$0xff]
    %v268 = vld [vmem:[#allocation5 + $0x128] sm:$0xff]
    %v269 = vld [vmem:[#allocation5 + $0x130] sm:$0xff]
    %v270 = vld [vmem:[#allocation5 + $0x138] sm:$0xff]
    %v271 = vld [vmem:[#allocation5 + $0x140] sm:$0xff]
    %v272 = vld [vmem:[#allocation5 + $0x148] sm:$0xff]
    %v273 = vld [vmem:[#allocation5 + $0x150] sm:$0xff]
    %v274 = vld [vmem:[#allocation5 + $0x158] sm:$0xff]
    %v275 = vld [vmem:[#allocation5 + $0x160] sm:$0xff]
    %v276 = vld [vmem:[#allocation5 + $0x168] sm:$0xff]
    %v277 = vld [vmem:[#allocation5 + $0x170] sm:$0xff]
    %v278 = vld [vmem:[#allocation5 + $0x178] sm:$0xff]
    %279 = vmatprep.subr.mxu0 %v232
    %280 = vmatpush1.msra.mxu0 %v231
    %281 = vmatprep.subr.mxu0 %v235
    %282 = vmatpush1.msra.mxu0 %v234
    %283 = vmatprep.subr.mxu0 %v238
    %284 = vmatpush1.msra.mxu0 %v237
    %285 = vmatprep.subr.mxu0 %v241
    %286 = vmatpush1.msra.mxu0 %v240
    %287 = vmatprep.subr.mxu0 %v244
    %288 = vmatpush1.msra.mxu0 %v243
    %289 = vmatprep.subr.mxu0 %v247
    %290 = vmatpush1.msra.mxu0 %v246
    %291 = vmatprep.subr.mxu0 %v250
    %292 = vmatpush1.msra.mxu0 %v249
    %293 = vmatprep.subr.mxu0 %v253
    %294 = vmatpush1.msra.mxu0 %v252
    %295 = vmatprep.subr.mxu0 %v256
    %296 = vmatpush1.msra.mxu0 %v255
    %297 = vmatprep.subr.mxu0 %v259
    %298 = vmatpush1.msra.mxu0 %v258
    %299 = vmatprep.subr.mxu0 %v262
    %300 = vmatpush1.msra.mxu0 %v261
    %301 = vmatprep.subr.mxu0 %v265
    %302 = vmatpush1.msra.mxu0 %v264
    %303 = vmatprep.subr.mxu0 %v268
    %304 = vmatpush1.msra.mxu0 %v267
    %305 = vmatprep.subr.mxu0 %v271
    %306 = vmatpush1.msra.mxu0 %v270
    %307 = vmatprep.subr.mxu0 %v274
    %308 = vmatpush1.msra.mxu0 %v273
    %309 = vmatprep.subr.mxu0 %v277
    %310 = vmatpush1.msra.mxu0 %v276
    %311 = vmatprep.subr.mxu0 0.0
    %312 = vmatpush1.msra.mxu0 0.0
    %313 = vmatprep.subr.mxu0 0.0
    %314 = vmatpush1.msra.mxu0 0.0
    %315 = vmatprep.subr.mxu0 0.0
    %316 = vmatpush1.msra.mxu0 0.0
    %317 = vmatprep.subr.mxu0 0.0
    %318 = vmatpush1.msra.mxu0 0.0
    %319 = vmatprep.subr.mxu0 0.0
    %320 = vmatpush1.msra.mxu0 0.0
    %321 = vmatprep.subr.mxu0 0.0
    %322 = vmatpush1.msra.mxu0 0.0
    %323 = vmatprep.subr.mxu0 0.0
    %324 = vmatpush1.msra.mxu0 0.0
    %325 = vmatprep.subr.mxu0 0.0
    %326 = vmatpush1.msra.mxu0 0.0
    %327 = vmatprep.subr.mxu0 0.0
    %328 = vmatpush1.msra.mxu0 0.0
    %329 = vmatprep.subr.mxu0 0.0
    %330 = vmatpush1.msra.mxu0 0.0
    %331 = vmatprep.subr.mxu0 0.0
    %332 = vmatpush1.msra.mxu0 0.0
    %333 = vmatprep.subr.mxu0 0.0
    %334 = vmatpush1.msra.mxu0 0.0
    %335 = vmatprep.subr.mxu0 0.0
    %336 = vmatpush1.msra.mxu0 0.0
    %337 = vmatprep.subr.mxu0 0.0
    %338 = vmatpush1.msra.mxu0 0.0
    %339 = vmatprep.subr.mxu0 0.0
    %340 = vmatpush1.msra.mxu0 0.0
    %341 = vmatprep.subr.mxu0 0.0
    %342 = vmatpush1.msra.mxu0 0.0
    %343 = vmatprep.mubr.f32.mxu0 0.0
    %344 = vmatmul.mubr.f32.gmra.mrb[0].mxu0 %v160
    %v345 = vpop.f32.mrb[0].mxu0
    %v346 = vadd.f32 0.0, %v345
    %v347 = vpop.f32.mrb[0].mxu0
    %v348 = vadd.f32 0.0, %v347
    %349 = vmatprep.mubr.f32.mxu0 0.0
    %350 = vmatmul.mubr.f32.gmra.mrb[0].mxu0 %v165
    %v351 = vpop.f32.mrb[0].mxu0
    %v352 = vadd.f32 0.0, %v351
    %v353 = vpop.f32.mrb[0].mxu0
    %v354 = vadd.f32 0.0, %v353
    %355 = vmatprep.mubr.f32.mxu0 0.0
    %356 = vmatmul.mubr.f32.gmra.mrb[0].mxu0 %v170
    %v357 = vpop.f32.mrb[0].mxu0
    %v358 = vadd.f32 0.0, %v357
    %v359 = vpop.f32.mrb[0].mxu0
    %v360 = vadd.f32 0.0, %v359
    %361 = vmatprep.mubr.f32.mxu0 0.0
    %362 = vmatmul.mubr.f32.gmra.mrb[0].mxu0 %v175
    %v363 = vpop.f32.mrb[0].mxu0
    %v364 = vadd.f32 0.0, %v363
    %v365 = vpop.f32.mrb[0].mxu0
    %v366 = vadd.f32 0.0, %v365
    %367 = vdwg.mxu0
    %368 = vmatprep.subr.mxu0 0.0
    %369 = vmatpush1.msra.mxu0 %v233
    %370 = vmatprep.subr.mxu0 0.0
    %371 = vmatpush1.msra.mxu0 %v236
    %372 = vmatprep.subr.mxu0 0.0
    %373 = vmatpush1.msra.mxu0 %v239
    %374 = vmatprep.subr.mxu0 0.0
    %375 = vmatpush1.msra.mxu0 %v242
    %376 = vmatprep.subr.mxu0 0.0
    %377 = vmatpush1.msra.mxu0 %v245
    %378 = vmatprep.subr.mxu0 0.0
    %379 = vmatpush1.msra.mxu0 %v248
    %380 = vmatprep.subr.mxu0 0.0
    %381 = vmatpush1.msra.mxu0 %v251
    %382 = vmatprep.subr.mxu0 0.0
    %383 = vmatpush1.msra.mxu0 %v254
    %384 = vmatprep.subr.mxu0 0.0
    %385 = vmatpush1.msra.mxu0 %v257
    %386 = vmatprep.subr.mxu0 0.0
    %387 = vmatpush1.msra.mxu0 %v260
    %388 = vmatprep.subr.mxu0 0.0
    %389 = vmatpush1.msra.mxu0 %v263
    %390 = vmatprep.subr.mxu0 0.0
    %391 = vmatpush1.msra.mxu0 %v266
    %392 = vmatprep.subr.mxu0 0.0
    %393 = vmatpush1.msra.mxu0 %v269
    %394 = vmatprep.subr.mxu0 0.0
    %395 = vmatpush1.msra.mxu0 %v272
    %396 = vmatprep.subr.mxu0 0.0
    %397 = vmatpush1.msra.mxu0 %v275
    %398 = vmatprep.subr.mxu0 0.0
    %399 = vmatpush1.msra.mxu0 %v278
    %400 = vmatprep.subr.mxu0 0.0
    %401 = vmatpush1.msra.mxu0 0.0
    %402 = vmatprep.subr.mxu0 0.0
    %403 = vmatpush1.msra.mxu0 0.0
    %404 = vmatprep.subr.mxu0 0.0
    %405 = vmatpush1.msra.mxu0 0.0
    %406 = vmatprep.subr.mxu0 0.0
    %407 = vmatpush1.msra.mxu0 0.0
    %408 = vmatprep.subr.mxu0 0.0
    %409 = vmatpush1.msra.mxu0 0.0
    %410 = vmatprep.subr.mxu0 0.0
    %411 = vmatpush1.msra.mxu0 0.0
    %412 = vmatprep.subr.mxu0 0.0
    %413 = vmatpush1.msra.mxu0 0.0
    %414 = vmatprep.subr.mxu0 0.0
    %415 = vmatpush1.msra.mxu0 0.0
    %416 = vmatprep.subr.mxu0 0.0
    %417 = vmatpush1.msra.mxu0 0.0
    %418 = vmatprep.subr.mxu0 0.0
    %419 = vmatpush1.msra.mxu0 0.0
    %420 = vmatprep.subr.mxu0 0.0
    %421 = vmatpush1.msra.mxu0 0.0
    %422 = vmatprep.subr.mxu0 0.0
    %423 = vmatpush1.msra.mxu0 0.0
    %424 = vmatprep.subr.mxu0 0.0
    %425 = vmatpush1.msra.mxu0 0.0
    %426 = vmatprep.subr.mxu0 0.0
    %427 = vmatpush1.msra.mxu0 0.0
    %428 = vmatprep.subr.mxu0 0.0
    %429 = vmatpush1.msra.mxu0 0.0
    %430 = vmatprep.subr.mxu0 0.0
    %431 = vmatpush1.msra.mxu0 0.0
    %432 = vmatprep.mubr.f32.mxu0 0.0
    %433 = vmatmul.mubr.f32.gmra.mrb[0].mxu0 %v160
    %v434 = vpop.f32.mrb[0].mxu0
    %v435 = vadd.f32 0.0, %v434
    %v436 = vpop.f32.mrb[0].mxu0
    %437 = vmatprep.mubr.f32.mxu0 0.0
    %438 = vmatmul.mubr.f32.gmra.mrb[0].mxu0 %v165
    %v439 = vpop.f32.mrb[0].mxu0
    %v440 = vadd.f32 0.0, %v439
    %v441 = vpop.f32.mrb[0].mxu0
    %442 = vmatprep.mubr.f32.mxu0 0.0
    %443 = vmatmul.mubr.f32.gmra.mrb[0].mxu0 %v170
    %v444 = vpop.f32.mrb[0].mxu0
    %v445 = vadd.f32 0.0, %v444
    %v446 = vpop.f32.mrb[0].mxu0
    %447 = vmatprep.mubr.f32.mxu0 0.0
    %448 = vmatmul.mubr.f32.gmra.mrb[0].mxu0 %v175
    %v449 = vpop.f32.mrb[0].mxu0
    %v450 = vadd.f32 0.0, %v449
    %v451 = vpop.f32.mrb[0].mxu0
    %452 = vdwg.mxu0
    %v453 = vrot.slane %v346, 7
    %v454 = vrot.slane %v352, 7
    %v455 = vrot.slane %v358, 7
    %v456 = vrot.slane %v364, 7
    %vm457 = vcmp.lt.s32.totalorder %v179, 1
    %v458 = vsel %vm457, %v455, %v456
    %v459 = vsel %vm457, %v454, %v455
    %v460 = vsel %vm457, %v453, %v454
    %v461 = vsel %vm457, %v456, %v453
    %vm462 = vcmp.ge.s32.totalorder %v227, 1
    %vm463 = vcmp.ge.s32.totalorder %v228, 1
    %vm464 = vcmp.ge.s32.totalorder %v229, 1
    %vm465 = vcmp.ge.s32.totalorder %v230, 1
    %v466 = vsel %vm462, 1, 0
    %v467 = vsel %vm463, 1, 0
    %v468 = vsel %vm464, 1, 0
    %v469 = vsel %vm465, 1, 0
    %vm470 = vcmp.eq.s32.totalorder %v466, 1
    %vm471 = vcmp.eq.s32.totalorder %v467, 1
    %vm472 = vcmp.eq.s32.totalorder %v468, 1
    %vm473 = vcmp.eq.s32.totalorder %v469, 1
    %v474 = vsel %vm470, %v461, 0.0
    %v475 = vsel %vm471, %v460, 0.0
    %v476 = vsel %vm472, %v459, 0.0
    %v477 = vsel %vm473, %v458, 0.0
    %v478 = vadd.f32 %v348, %v474
    %v479 = vadd.f32 %v354, %v475
    %v480 = vadd.f32 %v360, %v476
    %v481 = vadd.f32 %v366, %v477
    %v482 = vrot.slane %v435, 1
    %v483 = vrot.slane %v440, 1
    %v484 = vrot.slane %v445, 1
    %v485 = vrot.slane %v450, 1
    %vm486 = vcmp.lt.s32.totalorder %v179, 7
    %v487 = vsel %vm486, %v484, %v485
    %v488 = vsel %vm486, %v483, %v484
    %v489 = vsel %vm486, %v482, %v483
    %v490 = vsel %vm486, %v485, %v482
    %vm491 = vcmp.lt.s32.totalorder %v227, 15
    %vm492 = vcmp.lt.s32.totalorder %v228, 15
    %vm493 = vcmp.lt.s32.totalorder %v229, 15
    %vm494 = vcmp.lt.s32.totalorder %v230, 15
    %v495 = vsel %vm491, 1, 0
    %v496 = vsel %vm492, 1, 0
    %v497 = vsel %vm493, 1, 0
    %v498 = vsel %vm494, 1, 0
    %vm499 = vcmp.eq.s32.totalorder %v495, 1
    %vm500 = vcmp.eq.s32.totalorder %v496, 1
    %vm501 = vcmp.eq.s32.totalorder %v497, 1
    %vm502 = vcmp.eq.s32.totalorder %v498, 1
    %v503 = vsel %vm499, %v489, 0.0
    %v504 = vsel %vm500, %v488, 0.0
    %v505 = vsel %vm501, %v487, 0.0
    %v506 = vsel %vm502, %v490, 0.0
    %v507 = vadd.f32 %v478, %v503
    %v508 = vadd.f32 %v479, %v504
    %v509 = vadd.f32 %v480, %v505
    %v510 = vadd.f32 %v481, %v506
    %v511 = vtanh.pop %v507
    %v512 = vtanh.pop %v508
    %v513 = vtanh.pop %v509
    %v514 = vtanh.pop %v510
    %v515 = vxor.u32 %v507, 2147483648
    %v516 = vxor.u32 %v508, 2147483648
    %v517 = vxor.u32 %v509, 2147483648
    %v518 = vxor.u32 %v510, 2147483648
    %v519 = vmul.f32 %v515, 1.442695
    %v520 = vpow.pop %v519
    %v521 = vmul.f32 %v516, 1.442695
    %v522 = vpow.pop %v521
    %v523 = vmul.f32 %v517, 1.442695
    %v524 = vpow.pop %v523
    %v525 = vmul.f32 %v518, 1.442695
    %v526 = vpow.pop %v525
    %v527 = vadd.f32 %v520, 1.0
    %v528 = vadd.f32 %v522, 1.0
    %v529 = vadd.f32 %v524, 1.0
    %v530 = vadd.f32 %v526, 1.0
    %v531 = vrcp.pop %v527
    %v532 = vmul.f32 1.0, %v531
    %v533 = vrcp.pop %v528
    %v534 = vmul.f32 1.0, %v533
    %v535 = vrcp.pop %v529
    %v536 = vmul.f32 1.0, %v535
    %v537 = vrcp.pop %v530
    %v538 = vmul.f32 1.0, %v537
    %543 = vrot.lane.b32.xlu0 %v532, 112
    %v544 = vpop.permute.xlu0 %543
    %545 = vrot.lane.b32.xlu0 %v534, 112
    %v546 = vpop.permute.xlu0 %545
    %547 = vrot.lane.b32.xlu0 %v536, 112
    %v548 = vpop.permute.xlu0 %547
    %549 = vrot.lane.b32.xlu0 %v538, 112
    %v550 = vpop.permute.xlu0 %549
    %v555 = vmul.f32 %v511, %v544
    %v556 = vmul.f32 %v512, %v546
    %v557 = vmul.f32 %v513, %v548
    %v558 = vmul.f32 %v514, %v550
    %v559 = vld [vmem:[#allocation7] sm:$0xff]
    %v560 = vld [vmem:[#allocation7 + $0x8] sm:$0xff]
    %v561 = vld [vmem:[#allocation7 + $0x10] sm:$0x1]
    %v562 = vlaneseq
    %v563 = vshrl.u32 %v562, 7
    %v564 = vsub.s32 0, %v563
    %v565 = vrot.slane %v561, %v564
    %vm566 = vcmask 130048
    %v568 = vsel %vm566, %v555, 0
    %v571 = vsel %vm566, %v556, 0
    %v574 = vsel %vm566, %v557, 0
    %v577 = vsel %vm566, %v558, 0
    %579 = vmatprep.subr.mxu0 0.0
    %580 = vmatpush1.msra.mxu0 %v559
    %581 = vmatprep.subr.mxu0 0.0
    %582 = vmatpush1.msra.mxu0 %v560
    %583 = vmatprep.subr.mxu0 0.0
    %584 = vmatpush1.msra.mxu0 0.0
    %585 = vmatprep.subr.mxu0 0.0
    %586 = vmatpush1.msra.mxu0 0.0
    %587 = vmatprep.subr.mxu0 0.0
    %588 = vmatpush1.msra.mxu0 0.0
    %589 = vmatprep.subr.mxu0 0.0
    %590 = vmatpush1.msra.mxu0 0.0
    %591 = vmatprep.subr.mxu0 0.0
    %592 = vmatpush1.msra.mxu0 0.0
    %593 = vmatprep.subr.mxu0 0.0
    %594 = vmatpush1.msra.mxu0 0.0
    %595 = vmatprep.subr.mxu0 0.0
    %596 = vmatpush1.msra.mxu0 0.0
    %597 = vmatprep.subr.mxu0 0.0
    %598 = vmatpush1.msra.mxu0 0.0
    %599 = vmatprep.subr.mxu0 0.0
    %600 = vmatpush1.msra.mxu0 0.0
    %601 = vmatprep.subr.mxu0 0.0
    %602 = vmatpush1.msra.mxu0 0.0
    %603 = vmatprep.subr.mxu0 0.0
    %604 = vmatpush1.msra.mxu0 0.0
    %605 = vmatprep.subr.mxu0 0.0
    %606 = vmatpush1.msra.mxu0 0.0
    %607 = vmatprep.subr.mxu0 0.0
    %608 = vmatpush1.msra.mxu0 0.0
    %609 = vmatprep.subr.mxu0 0.0
    %610 = vmatpush1.msra.mxu0 0.0
    %611 = vmatprep.subr.mxu0 0.0
    %612 = vmatpush1.msra.mxu0 0.0
    %613 = vmatprep.subr.mxu0 0.0
    %614 = vmatpush1.msra.mxu0 0.0
    %615 = vmatprep.subr.mxu0 0.0
    %616 = vmatpush1.msra.mxu0 0.0
    %617 = vmatprep.subr.mxu0 0.0
    %618 = vmatpush1.msra.mxu0 0.0
    %619 = vmatprep.subr.mxu0 0.0
    %620 = vmatpush1.msra.mxu0 0.0
    %621 = vmatprep.subr.mxu0 0.0
    %622 = vmatpush1.msra.mxu0 0.0
    %623 = vmatprep.subr.mxu0 0.0
    %624 = vmatpush1.msra.mxu0 0.0
    %625 = vmatprep.subr.mxu0 0.0
    %626 = vmatpush1.msra.mxu0 0.0
    %627 = vmatprep.subr.mxu0 0.0
    %628 = vmatpush1.msra.mxu0 0.0
    %629 = vmatprep.subr.mxu0 0.0
    %630 = vmatpush1.msra.mxu0 0.0
    %631 = vmatprep.subr.mxu0 0.0
    %632 = vmatpush1.msra.mxu0 0.0
    %633 = vmatprep.subr.mxu0 0.0
    %634 = vmatpush1.msra.mxu0 0.0
    %635 = vmatprep.subr.mxu0 0.0
    %636 = vmatpush1.msra.mxu0 0.0
    %637 = vmatprep.subr.mxu0 0.0
    %638 = vmatpush1.msra.mxu0 0.0
    %639 = vmatprep.subr.mxu0 0.0
    %640 = vmatpush1.msra.mxu0 0.0
    %641 = vmatprep.subr.mxu0 0.0
    %642 = vmatpush1.msra.mxu0 0.0
    %643 = vmatprep.mubr.f32.mxu0 0.0
    %644 = vmatmul.mubr.f32.gmra.mrb[0].mxu0 %v568
    %v645 = vpop.f32.mrb[0].mxu0
    %v646 = vadd.f32 %v565, %v645
    %v647 = vpop.f32.mrb[0].mxu0
    %648 = vmatprep.mubr.f32.mxu0 0.0
    %649 = vmatmul.mubr.f32.gmra.mrb[0].mxu0 %v571
    %v650 = vpop.f32.mrb[0].mxu0
    %v651 = vadd.f32 %v565, %v650
    %v652 = vpop.f32.mrb[0].mxu0
    %653 = vmatprep.mubr.f32.mxu0 0.0
    %654 = vmatmul.mubr.f32.gmra.mrb[0].mxu0 %v574
    %v655 = vpop.f32.mrb[0].mxu0
    %v656 = vadd.f32 %v565, %v655
    %v657 = vpop.f32.mrb[0].mxu0
    %658 = vmatprep.mubr.f32.mxu0 0.0
    %659 = vmatmul.mubr.f32.gmra.mrb[0].mxu0 %v577
    %v660 = vpop.f32.mrb[0].mxu0
    %v661 = vadd.f32 %v565, %v660
    %v662 = vpop.f32.mrb[0].mxu0
    %663 = vdwg.mxu0
    %v664 = vadd.f32 %v160, %v646
    %v665 = vadd.f32 %v165, %v651
    %v666 = vadd.f32 %v170, %v656
    %v667 = vadd.f32 %v175, %v661
    %s668 = scalar_lea.vmem [#allocation5], 384
    %v669 = vld [vmem:[%s668] sm:$0xff]
    %v670 = vld [vmem:[%s668 + $0x8] sm:$0xff]
    %v671 = vld [vmem:[%s668 + $0x10] sm:$0xff]
    %v672 = vld [vmem:[%s668 + $0x18] sm:$0xff]
    %v673 = vld [vmem:[%s668 + $0x20] sm:$0xff]
    %v674 = vld [vmem:[%s668 + $0x28] sm:$0xff]
    %v675 = vld [vmem:[%s668 + $0x30] sm:$0xff]
    %v676 = vld [vmem:[%s668 + $0x38] sm:$0xff]
    %v677 = vld [vmem:[%s668 + $0x40] sm:$0xff]
    %v678 = vld [vmem:[%s668 + $0x48] sm:$0xff]
    %v679 = vld [vmem:[%s668 + $0x50] sm:$0xff]
    %v680 = vld [vmem:[%s668 + $0x58] sm:$0xff]
    %v681 = vld [vmem:[%s668 + $0x60] sm:$0xff]
    %v682 = vld [vmem:[%s668 + $0x68] sm:$0xff]
    %v683 = vld [vmem:[%s668 + $0x70] sm:$0xff]
    %v684 = vld [vmem:[%s668 + $0x78] sm:$0xff]
    %v685 = vld [vmem:[%s668 + $0x80] sm:$0xff]
    %v686 = vld [vmem:[%s668 + $0x88] sm:$0xff]
    %v687 = vld [vmem:[%s668 + $0x90] sm:$0xff]
    %v688 = vld [vmem:[%s668 + $0x98] sm:$0xff]
    %v689 = vld [vmem:[%s668 + $0xa0] sm:$0xff]
    %v690 = vld [vmem:[%s668 + $0xa8] sm:$0xff]
    %v691 = vld [vmem:[%s668 + $0xb0] sm:$0xff]
    %v692 = vld [vmem:[%s668 + $0xb8] sm:$0xff]
    %v693 = vld [vmem:[%s668 + $0xc0] sm:$0xff]
    %v694 = vld [vmem:[%s668 + $0xc8] sm:$0xff]
    %v695 = vld [vmem:[%s668 + $0xd0] sm:$0xff]
    %v696 = vld [vmem:[%s668 + $0xd8] sm:$0xff]
    %v697 = vld [vmem:[%s668 + $0xe0] sm:$0xff]
    %v698 = vld [vmem:[%s668 + $0xe8] sm:$0xff]
    %v699 = vld [vmem:[%s668 + $0xf0] sm:$0xff]
    %v700 = vld [vmem:[%s668 + $0xf8] sm:$0xff]
    %v701 = vld [vmem:[%s668 + $0x100] sm:$0xff]
    %v702 = vld [vmem:[%s668 + $0x108] sm:$0xff]
    %v703 = vld [vmem:[%s668 + $0x110] sm:$0xff]
    %v704 = vld [vmem:[%s668 + $0x118] sm:$0xff]
    %v705 = vld [vmem:[%s668 + $0x120] sm:$0xff]
    %v706 = vld [vmem:[%s668 + $0x128] sm:$0xff]
    %v707 = vld [vmem:[%s668 + $0x130] sm:$0xff]
    %v708 = vld [vmem:[%s668 + $0x138] sm:$0xff]
    %v709 = vld [vmem:[%s668 + $0x140] sm:$0xff]
    %v710 = vld [vmem:[%s668 + $0x148] sm:$0xff]
    %v711 = vld [vmem:[%s668 + $0x150] sm:$0xff]
    %v712 = vld [vmem:[%s668 + $0x158] sm:$0xff]
    %v713 = vld [vmem:[%s668 + $0x160] sm:$0xff]
    %v714 = vld [vmem:[%s668 + $0x168] sm:$0xff]
    %v715 = vld [vmem:[%s668 + $0x170] sm:$0xff]
    %v716 = vld [vmem:[%s668 + $0x178] sm:$0xff]
    %717 = vmatprep.subr.mxu0 %v670
    %718 = vmatpush1.msra.mxu0 %v669
    %719 = vmatprep.subr.mxu0 %v673
    %720 = vmatpush1.msra.mxu0 %v672
    %721 = vmatprep.subr.mxu0 %v676
    %722 = vmatpush1.msra.mxu0 %v675
    %723 = vmatprep.subr.mxu0 %v679
    %724 = vmatpush1.msra.mxu0 %v678
    %725 = vmatprep.subr.mxu0 %v682
    %726 = vmatpush1.msra.mxu0 %v681
    %727 = vmatprep.subr.mxu0 %v685
    %728 = vmatpush1.msra.mxu0 %v684
    %729 = vmatprep.subr.mxu0 %v688
    %730 = vmatpush1.msra.mxu0 %v687
    %731 = vmatprep.subr.mxu0 %v691
    %732 = vmatpush1.msra.mxu0 %v690
    %733 = vmatprep.subr.mxu0 %v694
    %734 = vmatpush1.msra.mxu0 %v693
    %735 = vmatprep.subr.mxu0 %v697
    %736 = vmatpush1.msra.mxu0 %v696
    %737 = vmatprep.subr.mxu0 %v700
    %738 = vmatpush1.msra.mxu0 %v699
    %739 = vmatprep.subr.mxu0 %v703
    %740 = vmatpush1.msra.mxu0 %v702
    %741 = vmatprep.subr.mxu0 %v706
    %742 = vmatpush1.msra.mxu0 %v705
    %743 = vmatprep.subr.mxu0 %v709
    %744 = vmatpush1.msra.mxu0 %v708
    %745 = vmatprep.subr.mxu0 %v712
    %746 = vmatpush1.msra.mxu0 %v711
    %747 = vmatprep.subr.mxu0 %v715
    %748 = vmatpush1.msra.mxu0 %v714
    %749 = vmatprep.subr.mxu0 0.0
    %750 = vmatpush1.msra.mxu0 0.0
    %751 = vmatprep.subr.mxu0 0.0
    %752 = vmatpush1.msra.mxu0 0.0
    %753 = vmatprep.subr.mxu0 0.0
    %754 = vmatpush1.msra.mxu0 0.0
    %755 = vmatprep.subr.mxu0 0.0
    %756 = vmatpush1.msra.mxu0 0.0
    %757 = vmatprep.subr.mxu0 0.0
    %758 = vmatpush1.msra.mxu0 0.0
    %759 = vmatprep.subr.mxu0 0.0
    %760 = vmatpush1.msra.mxu0 0.0
    %761 = vmatprep.subr.mxu0 0.0
    %762 = vmatpush1.msra.mxu0 0.0
    %763 = vmatprep.subr.mxu0 0.0
    %764 = vmatpush1.msra.mxu0 0.0
    %765 = vmatprep.subr.mxu0 0.0
    %766 = vmatpush1.msra.mxu0 0.0
    %767 = vmatprep.subr.mxu0 0.0
    %768 = vmatpush1.msra.mxu0 0.0
    %769 = vmatprep.subr.mxu0 0.0
    %770 = vmatpush1.msra.mxu0 0.0
    %771 = vmatprep.subr.mxu0 0.0
    %772 = vmatpush1.msra.mxu0 0.0
    %773 = vmatprep.subr.mxu0 0.0
    %774 = vmatpush1.msra.mxu0 0.0
    %775 = vmatprep.subr.mxu0 0.0
    %776 = vmatpush1.msra.mxu0 0.0
    %777 = vmatprep.subr.mxu0 0.0
    %778 = vmatpush1.msra.mxu0 0.0
    %779 = vmatprep.subr.mxu0 0.0
    %780 = vmatpush1.msra.mxu0 0.0
    %781 = vmatprep.mubr.f32.mxu0 0.0
    %782 = vmatmul.mubr.f32.gmra.mrb[0].mxu0 %v664
    %v783 = vpop.f32.mrb[0].mxu0
    %v784 = vadd.f32 0.0, %v783
    %v785 = vpop.f32.mrb[0].mxu0
    %v786 = vadd.f32 0.0, %v785
    %787 = vmatprep.mubr.f32.mxu0 0.0
    %788 = vmatmul.mubr.f32.gmra.mrb[0].mxu0 %v665
    %v789 = vpop.f32.mrb[0].mxu0
    %v790 = vadd.f32 0.0, %v789
    %v791 = vpop.f32.mrb[0].mxu0
    %v792 = vadd.f32 0.0, %v791
    %793 = vmatprep.mubr.f32.mxu0 0.0
    %794 = vmatmul.mubr.f32.gmra.mrb[0].mxu0 %v666
    %v795 = vpop.f32.mrb[0].mxu0
    %v796 = vadd.f32 0.0, %v795
    %v797 = vpop.f32.mrb[0].mxu0
    %v798 = vadd.f32 0.0, %v797
    %799 = vmatprep.mubr.f32.mxu0 0.0
    %800 = vmatmul.mubr.f32.gmra.mrb[0].mxu0 %v667
    %v801 = vpop.f32.mrb[0].mxu0
    %v802 = vadd.f32 0.0, %v801
    %v803 = vpop.f32.mrb[0].mxu0
    %v804 = vadd.f32 0.0, %v803
    %805 = vdwg.mxu0
    %806 = vmatprep.subr.mxu0 0.0
    %807 = vmatpush1.msra.mxu0 %v671
    %808 = vmatprep.subr.mxu0 0.0
    %809 = vmatpush1.msra.mxu0 %v674
    %810 = vmatprep.subr.mxu0 0.0
    %811 = vmatpush1.msra.mxu0 %v677
    %812 = vmatprep.subr.mxu0 0.0
    %813 = vmatpush1.msra.mxu0 %v680
    %814 = vmatprep.subr.mxu0 0.0
    %815 = vmatpush1.msra.mxu0 %v683
    %816 = vmatprep.subr.mxu0 0.0
    %817 = vmatpush1.msra.mxu0 %v686
    %818 = vmatprep.subr.mxu0 0.0
    %819 = vmatpush1.msra.mxu0 %v689
    %820 = vmatprep.subr.mxu0 0.0
    %821 = vmatpush1.msra.mxu0 %v692
    %822 = vmatprep.subr.mxu0 0.0
    %823 = vmatpush1.msra.mxu0 %v695
    %824 = vmatprep.subr.mxu0 0.0
    %825 = vmatpush1.msra.mxu0 %v698
    %826 = vmatprep.subr.mxu0 0.0
    %827 = vmatpush1.msra.mxu0 %v701
    %828 = vmatprep.subr.mxu0 0.0
    %829 = vmatpush1.msra.mxu0 %v704
    %830 = vmatprep.subr.mxu0 0.0
    %831 = vmatpush1.msra.mxu0 %v707
    %832 = vmatprep.subr.mxu0 0.0
    %833 = vmatpush1.msra.mxu0 %v710
    %834 = vmatprep.subr.mxu0 0.0
    %835 = vmatpush1.msra.mxu0 %v713
    %836 = vmatprep.subr.mxu0 0.0
    %837 = vmatpush1.msra.mxu0 %v716
    %838 = vmatprep.subr.mxu0 0.0
    %839 = vmatpush1.msra.mxu0 0.0
    %840 = vmatprep.subr.mxu0 0.0
    %841 = vmatpush1.msra.mxu0 0.0
    %842 = vmatprep.subr.mxu0 0.0
    %843 = vmatpush1.msra.mxu0 0.0
    %844 = vmatprep.subr.mxu0 0.0
    %845 = vmatpush1.msra.mxu0 0.0
    %846 = vmatprep.subr.mxu0 0.0
    %847 = vmatpush1.msra.mxu0 0.0
    %848 = vmatprep.subr.mxu0 0.0
    %849 = vmatpush1.msra.mxu0 0.0
    %850 = vmatprep.subr.mxu0 0.0
    %851 = vmatpush1.msra.mxu0 0.0
    %852 = vmatprep.subr.mxu0 0.0
    %853 = vmatpush1.msra.mxu0 0.0
    %854 = vmatprep.subr.mxu0 0.0
    %855 = vmatpush1.msra.mxu0 0.0
    %856 = vmatprep.subr.mxu0 0.0
    %857 = vmatpush1.msra.mxu0 0.0
    %858 = vmatprep.subr.mxu0 0.0
    %859 = vmatpush1.msra.mxu0 0.0
    %860 = vmatprep.subr.mxu0 0.0
    %861 = vmatpush1.msra.mxu0 0.0
    %862 = vmatprep.subr.mxu0 0.0
    %863 = vmatpush1.msra.mxu0 0.0
    %864 = vmatprep.subr.mxu0 0.0
    %865 = vmatpush1.msra.mxu0 0.0
    %866 = vmatprep.subr.mxu0 0.0
    %867 = vmatpush1.msra.mxu0 0.0
    %868 = vmatprep.subr.mxu0 0.0
    %869 = vmatpush1.msra.mxu0 0.0
    %870 = vmatprep.mubr.f32.mxu0 0.0
    %871 = vmatmul.mubr.f32.gmra.mrb[0].mxu0 %v664
    %v872 = vpop.f32.mrb[0].mxu0
    %v873 = vadd.f32 0.0, %v872
    %v874 = vpop.f32.mrb[0].mxu0
    %875 = vmatprep.mubr.f32.mxu0 0.0
    %876 = vmatmul.mubr.f32.gmra.mrb[0].mxu0 %v665
    %v877 = vpop.f32.mrb[0].mxu0
    %v878 = vadd.f32 0.0, %v877
    %v879 = vpop.f32.mrb[0].mxu0
    %880 = vmatprep.mubr.f32.mxu0 0.0
    %881 = vmatmul.mubr.f32.gmra.mrb[0].mxu0 %v666
    %v882 = vpop.f32.mrb[0].mxu0
    %v883 = vadd.f32 0.0, %v882
    %v884 = vpop.f32.mrb[0].mxu0
    %885 = vmatprep.mubr.f32.mxu0 0.0
    %886 = vmatmul.mubr.f32.gmra.mrb[0].mxu0 %v667
    %v887 = vpop.f32.mrb[0].mxu0
    %v888 = vadd.f32 0.0, %v887
    %v889 = vpop.f32.mrb[0].mxu0
    %890 = vdwg.mxu0
    %v891 = vrot.slane %v784, 6
    %v892 = vrot.slane %v790, 6
    %v893 = vrot.slane %v796, 6
    %v894 = vrot.slane %v802, 6
    %vm895 = vcmp.lt.s32.totalorder %v179, 2
    %v896 = vsel %vm895, %v893, %v894
    %v897 = vsel %vm895, %v892, %v893
    %v898 = vsel %vm895, %v891, %v892
    %v899 = vsel %vm895, %v894, %v891
    %vm900 = vcmp.ge.s32.totalorder %v227, 2
    %vm901 = vcmp.ge.s32.totalorder %v228, 2
    %vm902 = vcmp.ge.s32.totalorder %v229, 2
    %vm903 = vcmp.ge.s32.totalorder %v230, 2
    %v904 = vsel %vm900, 1, 0
    %v905 = vsel %vm901, 1, 0
    %v906 = vsel %vm902, 1, 0
    %v907 = vsel %vm903, 1, 0
    %vm908 = vcmp.eq.s32.totalorder %v904, 1
    %vm909 = vcmp.eq.s32.totalorder %v905, 1
    %vm910 = vcmp.eq.s32.totalorder %v906, 1
    %vm911 = vcmp.eq.s32.totalorder %v907, 1
    %v912 = vsel %vm908, %v899, 0.0
    %v913 = vsel %vm909, %v898, 0.0
    %v914 = vsel %vm910, %v897, 0.0
    %v915 = vsel %vm911, %v896, 0.0
    %v916 = vadd.f32 %v786, %v912
    %v917 = vadd.f32 %v792, %v913
    %v918 = vadd.f32 %v798, %v914
    %v919 = vadd.f32 %v804, %v915
    %v920 = vrot.slane %v873, 2
    %v921 = vrot.slane %v878, 2
    %v922 = vrot.slane %v883, 2
    %v923 = vrot.slane %v888, 2
    %vm924 = vcmp.lt.s32.totalorder %v179, 6
    %v925 = vsel %vm924, %v922, %v923
    %v926 = vsel %vm924, %v921, %v922
    %v927 = vsel %vm924, %v920, %v921
    %v928 = vsel %vm924, %v923, %v920
    %vm929 = vcmp.lt.s32.totalorder %v227, 14
    %vm930 = vcmp.lt.s32.totalorder %v228, 14
    %vm931 = vcmp.lt.s32.totalorder %v229, 14
    %vm932 = vcmp.lt.s32.totalorder %v230, 14
    %v933 = vsel %vm929, 1, 0
    %v934 = vsel %vm930, 1, 0
    %v935 = vsel %vm931, 1, 0
    %v936 = vsel %vm932, 1, 0
    %vm937 = vcmp.eq.s32.totalorder %v933, 1
    %vm938 = vcmp.eq.s32.totalorder %v934, 1
    %vm939 = vcmp.eq.s32.totalorder %v935, 1
    %vm940 = vcmp.eq.s32.totalorder %v936, 1
    %v941 = vsel %vm937, %v927, 0.0
    %v942 = vsel %vm938, %v926, 0.0
    %v943 = vsel %vm939, %v925, 0.0
    %v944 = vsel %vm940, %v928, 0.0
    %v945 = vadd.f32 %v916, %v941
    %v946 = vadd.f32 %v917, %v942
    %v947 = vadd.f32 %v918, %v943
    %v948 = vadd.f32 %v919, %v944
    %v949 = vtanh.pop %v945
    %v950 = vtanh.pop %v946
    %v951 = vtanh.pop %v947
    %v952 = vtanh.pop %v948
    %v953 = vxor.u32 %v945, 2147483648
    %v954 = vxor.u32 %v946, 2147483648
    %v955 = vxor.u32 %v947, 2147483648
    %v956 = vxor.u32 %v948, 2147483648
    %v957 = vmul.f32 %v953, 1.442695
    %v958 = vpow.pop %v957
    %v959 = vmul.f32 %v954, 1.442695
    %v960 = vpow.pop %v959
    %v961 = vmul.f32 %v955, 1.442695
    %v962 = vpow.pop %v961
    %v963 = vmul.f32 %v956, 1.442695
    %v964 = vpow.pop %v963
    %v965 = vadd.f32 %v958, 1.0
    %v966 = vadd.f32 %v960, 1.0
    %v967 = vadd.f32 %v962, 1.0
    %v968 = vadd.f32 %v964, 1.0
    %v969 = vrcp.pop %v965
    %v970 = vmul.f32 1.0, %v969
    %v971 = vrcp.pop %v966
    %v972 = vmul.f32 1.0, %v971
    %v973 = vrcp.pop %v967
    %v974 = vmul.f32 1.0, %v973
    %v975 = vrcp.pop %v968
    %v976 = vmul.f32 1.0, %v975
    %981 = vrot.lane.b32.xlu0 %v970, 112
    %v982 = vpop.permute.xlu0 %981
    %983 = vrot.lane.b32.xlu0 %v972, 112
    %v984 = vpop.permute.xlu0 %983
    %985 = vrot.lane.b32.xlu0 %v974, 112
    %v986 = vpop.permute.xlu0 %985
    %987 = vrot.lane.b32.xlu0 %v976, 112
    %v988 = vpop.permute.xlu0 %987
    %v993 = vmul.f32 %v949, %v982
    %v994 = vmul.f32 %v950, %v984
    %v995 = vmul.f32 %v951, %v986
    %v996 = vmul.f32 %v952, %v988
    %s997 = scalar_lea.vmem [#allocation7], 24
    %v998 = vld [vmem:[%s997] sm:$0xff]
    %v999 = vld [vmem:[%s997 + $0x8] sm:$0xff]
    %v1000 = vld [vmem:[%s997 + $0x10] sm:$0x1]
    %v1001 = vlaneseq
    %v1002 = vshrl.u32 %v1001, 7
    %v1003 = vsub.s32 0, %v1002
    %v1004 = vrot.slane %v1000, %v1003
    %v1006 = vsel %vm566, %v993, 0
    %v1009 = vsel %vm566, %v994, 0
    %v1012 = vsel %vm566, %v995, 0
    %v1015 = vsel %vm566, %v996, 0
    %1017 = vmatprep.subr.mxu0 0.0
    %1018 = vmatpush1.msra.mxu0 %v998
    %1019 = vmatprep.subr.mxu0 0.0
    %1020 = vmatpush1.msra.mxu0 %v999
    %1021 = vmatprep.subr.mxu0 0.0
    %1022 = vmatpush1.msra.mxu0 0.0
    %1023 = vmatprep.subr.mxu0 0.0
    %1024 = vmatpush1.msra.mxu0 0.0
    %1025 = vmatprep.subr.mxu0 0.0
    %1026 = vmatpush1.msra.mxu0 0.0
    %1027 = vmatprep.subr.mxu0 0.0
    %1028 = vmatpush1.msra.mxu0 0.0
    %1029 = vmatprep.subr.mxu0 0.0
    %1030 = vmatpush1.msra.mxu0 0.0
    %1031 = vmatprep.subr.mxu0 0.0
    %1032 = vmatpush1.msra.mxu0 0.0
    %1033 = vmatprep.subr.mxu0 0.0
    %1034 = vmatpush1.msra.mxu0 0.0
    %1035 = vmatprep.subr.mxu0 0.0
    %1036 = vmatpush1.msra.mxu0 0.0
    %1037 = vmatprep.subr.mxu0 0.0
    %1038 = vmatpush1.msra.mxu0 0.0
    %1039 = vmatprep.subr.mxu0 0.0
    %1040 = vmatpush1.msra.mxu0 0.0
    %1041 = vmatprep.subr.mxu0 0.0
    %1042 = vmatpush1.msra.mxu0 0.0
    %1043 = vmatprep.subr.mxu0 0.0
    %1044 = vmatpush1.msra.mxu0 0.0
    %1045 = vmatprep.subr.mxu0 0.0
    %1046 = vmatpush1.msra.mxu0 0.0
    %1047 = vmatprep.subr.mxu0 0.0
    %1048 = vmatpush1.msra.mxu0 0.0
    %1049 = vmatprep.subr.mxu0 0.0
    %1050 = vmatpush1.msra.mxu0 0.0
    %1051 = vmatprep.subr.mxu0 0.0
    %1052 = vmatpush1.msra.mxu0 0.0
    %1053 = vmatprep.subr.mxu0 0.0
    %1054 = vmatpush1.msra.mxu0 0.0
    %1055 = vmatprep.subr.mxu0 0.0
    %1056 = vmatpush1.msra.mxu0 0.0
    %1057 = vmatprep.subr.mxu0 0.0
    %1058 = vmatpush1.msra.mxu0 0.0
    %1059 = vmatprep.subr.mxu0 0.0
    %1060 = vmatpush1.msra.mxu0 0.0
    %1061 = vmatprep.subr.mxu0 0.0
    %1062 = vmatpush1.msra.mxu0 0.0
    %1063 = vmatprep.subr.mxu0 0.0
    %1064 = vmatpush1.msra.mxu0 0.0
    %1065 = vmatprep.subr.mxu0 0.0
    %1066 = vmatpush1.msra.mxu0 0.0
    %1067 = vmatprep.subr.mxu0 0.0
    %1068 = vmatpush1.msra.mxu0 0.0
    %1069 = vmatprep.subr.mxu0 0.0
    %1070 = vmatpush1.msra.mxu0 0.0
    %1071 = vmatprep.subr.mxu0 0.0
    %1072 = vmatpush1.msra.mxu0 0.0
    %1073 = vmatprep.subr.mxu0 0.0
    %1074 = vmatpush1.msra.mxu0 0.0
    %1075 = vmatprep.subr.mxu0 0.0
    %1076 = vmatpush1.msra.mxu0 0.0
    %1077 = vmatprep.subr.mxu0 0.0
    %1078 = vmatpush1.msra.mxu0 0.0
    %1079 = vmatprep.subr.mxu0 0.0
    %1080 = vmatpush1.msra.mxu0 0.0
    %1081 = vmatprep.mubr.f32.mxu0 0.0
    %1082 = vmatmul.mubr.f32.gmra.mrb[0].mxu0 %v1006
    %v1083 = vpop.f32.mrb[0].mxu0
    %v1084 = vadd.f32 %v1004, %v1083
    %v1085 = vpop.f32.mrb[0].mxu0
    %1086 = vmatprep.mubr.f32.mxu0 0.0
    %1087 = vmatmul.mubr.f32.gmra.mrb[0].mxu0 %v1009
    %v1088 = vpop.f32.mrb[0].mxu0
    %v1089 = vadd.f32 %v1004, %v1088
    %v1090 = vpop.f32.mrb[0].mxu0
    %1091 = vmatprep.mubr.f32.mxu0 0.0
    %1092 = vmatmul.mubr.f32.gmra.mrb[0].mxu0 %v1012
    %v1093 = vpop.f32.mrb[0].mxu0
    %v1094 = vadd.f32 %v1004, %v1093
    %v1095 = vpop.f32.mrb[0].mxu0
    %1096 = vmatprep.mubr.f32.mxu0 0.0
    %1097 = vmatmul.mubr.f32.gmra.mrb[0].mxu0 %v1015
    %v1098 = vpop.f32.mrb[0].mxu0
    %v1099 = vadd.f32 %v1004, %v1098
    %v1100 = vpop.f32.mrb[0].mxu0
    %1101 = vdwg.mxu0
    %v1102 = vadd.f32 %v664, %v1084
    %v1103 = vadd.f32 %v665, %v1089
    %v1104 = vadd.f32 %v666, %v1094
    %v1105 = vadd.f32 %v667, %v1099
    %s1106 = scalar_lea.vmem [#allocation5], 768
    %v1107 = vld [vmem:[%s1106] sm:$0xff]
    %v1108 = vld [vmem:[%s1106 + $0x8] sm:$0xff]
    %v1109 = vld [vmem:[%s1106 + $0x10] sm:$0xff]
    %v1110 = vld [vmem:[%s1106 + $0x18] sm:$0xff]
    %v1111 = vld [vmem:[%s1106 + $0x20] sm:$0xff]
    %v1112 = vld [vmem:[%s1106 + $0x28] sm:$0xff]
    %v1113 = vld [vmem:[%s1106 + $0x30] sm:$0xff]
    %v1114 = vld [vmem:[%s1106 + $0x38] sm:$0xff]
    %v1115 = vld [vmem:[%s1106 + $0x40] sm:$0xff]
    %v1116 = vld [vmem:[%s1106 + $0x48] sm:$0xff]
    %v1117 = vld [vmem:[%s1106 + $0x50] sm:$0xff]
    %v1118 = vld [vmem:[%s1106 + $0x58] sm:$0xff]
    %v1119 = vld [vmem:[%s1106 + $0x60] sm:$0xff]
    %v1120 = vld [vmem:[%s1106 + $0x68] sm:$0xff]
    %v1121 = vld [vmem:[%s1106 + $0x70] sm:$0xff]
    %v1122 = vld [vmem:[%s1106 + $0x78] sm:$0xff]
    %v1123 = vld [vmem:[%s1106 + $0x80] sm:$0xff]
    %v1124 = vld [vmem:[%s1106 + $0x88] sm:$0xff]
    %v1125 = vld [vmem:[%s1106 + $0x90] sm:$0xff]
    %v1126 = vld [vmem:[%s1106 + $0x98] sm:$0xff]
    %v1127 = vld [vmem:[%s1106 + $0xa0] sm:$0xff]
    %v1128 = vld [vmem:[%s1106 + $0xa8] sm:$0xff]
    %v1129 = vld [vmem:[%s1106 + $0xb0] sm:$0xff]
    %v1130 = vld [vmem:[%s1106 + $0xb8] sm:$0xff]
    %v1131 = vld [vmem:[%s1106 + $0xc0] sm:$0xff]
    %v1132 = vld [vmem:[%s1106 + $0xc8] sm:$0xff]
    %v1133 = vld [vmem:[%s1106 + $0xd0] sm:$0xff]
    %v1134 = vld [vmem:[%s1106 + $0xd8] sm:$0xff]
    %v1135 = vld [vmem:[%s1106 + $0xe0] sm:$0xff]
    %v1136 = vld [vmem:[%s1106 + $0xe8] sm:$0xff]
    %v1137 = vld [vmem:[%s1106 + $0xf0] sm:$0xff]
    %v1138 = vld [vmem:[%s1106 + $0xf8] sm:$0xff]
    %v1139 = vld [vmem:[%s1106 + $0x100] sm:$0xff]
    %v1140 = vld [vmem:[%s1106 + $0x108] sm:$0xff]
    %v1141 = vld [vmem:[%s1106 + $0x110] sm:$0xff]
    %v1142 = vld [vmem:[%s1106 + $0x118] sm:$0xff]
    %v1143 = vld [vmem:[%s1106 + $0x120] sm:$0xff]
    %v1144 = vld [vmem:[%s1106 + $0x128] sm:$0xff]
    %v1145 = vld [vmem:[%s1106 + $0x130] sm:$0xff]
    %v1146 = vld [vmem:[%s1106 + $0x138] sm:$0xff]
    %v1147 = vld [vmem:[%s1106 + $0x140] sm:$0xff]
    %v1148 = vld [vmem:[%s1106 + $0x148] sm:$0xff]
    %v1149 = vld [vmem:[%s1106 + $0x150] sm:$0xff]
    %v1150 = vld [vmem:[%s1106 + $0x158] sm:$0xff]
    %v1151 = vld [vmem:[%s1106 + $0x160] sm:$0xff]
    %v1152 = vld [vmem:[%s1106 + $0x168] sm:$0xff]
    %v1153 = vld [vmem:[%s1106 + $0x170] sm:$0xff]
    %v1154 = vld [vmem:[%s1106 + $0x178] sm:$0xff]
    %1155 = vmatprep.subr.mxu0 %v1108
    %1156 = vmatpush1.msra.mxu0 %v1107
    %1157 = vmatprep.subr.mxu0 %v1111
    %1158 = vmatpush1.msra.mxu0 %v1110
    %1159 = vmatprep.subr.mxu0 %v1114
    %1160 = vmatpush1.msra.mxu0 %v1113
    %1161 = vmatprep.subr.mxu0 %v1117
    %1162 = vmatpush1.msra.mxu0 %v1116
    %1163 = vmatprep.subr.mxu0 %v1120
    %1164 = vmatpush1.msra.mxu0 %v1119
    %1165 = vmatprep.subr.mxu0 %v1123
    %1166 = vmatpush1.msra.mxu0 %v1122
    %1167 = vmatprep.subr.mxu0 %v1126
    %1168 = vmatpush1.msra.mxu0 %v1125
    %1169 = vmatprep.subr.mxu0 %v1129
    %1170 = vmatpush1.msra.mxu0 %v1128
    %1171 = vmatprep.subr.mxu0 %v1132
    %1172 = vmatpush1.msra.mxu0 %v1131
    %1173 = vmatprep.subr.mxu0 %v1135
    %1174 = vmatpush1.msra.mxu0 %v1134
    %1175 = vmatprep.subr.mxu0 %v1138
    %1176 = vmatpush1.msra.mxu0 %v1137
    %1177 = vmatprep.subr.mxu0 %v1141
    %1178 = vmatpush1.msra.mxu0 %v1140
    %1179 = vmatprep.subr.mxu0 %v1144
    %1180 = vmatpush1.msra.mxu0 %v1143
    %1181 = vmatprep.subr.mxu0 %v1147
    %1182 = vmatpush1.msra.mxu0 %v1146
    %1183 = vmatprep.subr.mxu0 %v1150
    %1184 = vmatpush1.msra.mxu0 %v1149
    %1185 = vmatprep.subr.mxu0 %v1153
    %1186 = vmatpush1.msra.mxu0 %v1152
    %1187 = vmatprep.subr.mxu0 0.0
    %1188 = vmatpush1.msra.mxu0 0.0
    %1189 = vmatprep.subr.mxu0 0.0
    %1190 = vmatpush1.msra.mxu0 0.0
    %1191 = vmatprep.subr.mxu0 0.0
    %1192 = vmatpush1.msra.mxu0 0.0
    %1193 = vmatprep.subr.mxu0 0.0
    %1194 = vmatpush1.msra.mxu0 0.0
    %1195 = vmatprep.subr.mxu0 0.0
    %1196 = vmatpush1.msra.mxu0 0.0
    %1197 = vmatprep.subr.mxu0 0.0
    %1198 = vmatpush1.msra.mxu0 0.0
    %1199 = vmatprep.subr.mxu0 0.0
    %1200 = vmatpush1.msra.mxu0 0.0
    %1201 = vmatprep.subr.mxu0 0.0
    %1202 = vmatpush1.msra.mxu0 0.0
    %1203 = vmatprep.subr.mxu0 0.0
    %1204 = vmatpush1.msra.mxu0 0.0
    %1205 = vmatprep.subr.mxu0 0.0
    %1206 = vmatpush1.msra.mxu0 0.0
    %1207 = vmatprep.subr.mxu0 0.0
    %1208 = vmatpush1.msra.mxu0 0.0
    %1209 = vmatprep.subr.mxu0 0.0
    %1210 = vmatpush1.msra.mxu0 0.0
    %1211 = vmatprep.subr.mxu0 0.0
    %1212 = vmatpush1.msra.mxu0 0.0
    %1213 = vmatprep.subr.mxu0 0.0
    %1214 = vmatpush1.msra.mxu0 0.0
    %1215 = vmatprep.subr.mxu0 0.0
    %1216 = vmatpush1.msra.mxu0 0.0
    %1217 = vmatprep.subr.mxu0 0.0
    %1218 = vmatpush1.msra.mxu0 0.0
    %1219 = vmatprep.mubr.f32.mxu0 0.0
    %1220 = vmatmul.mubr.f32.gmra.mrb[0].mxu0 %v1102
    %v1221 = vpop.f32.mrb[0].mxu0
    %v1222 = vadd.f32 0.0, %v1221
    %v1223 = vpop.f32.mrb[0].mxu0
    %v1224 = vadd.f32 0.0, %v1223
    %1225 = vmatprep.mubr.f32.mxu0 0.0
    %1226 = vmatmul.mubr.f32.gmra.mrb[0].mxu0 %v1103
    %v1227 = vpop.f32.mrb[0].mxu0
    %v1228 = vadd.f32 0.0, %v1227
    %v1229 = vpop.f32.mrb[0].mxu0
    %v1230 = vadd.f32 0.0, %v1229
    %1231 = vmatprep.mubr.f32.mxu0 0.0
    %1232 = vmatmul.mubr.f32.gmra.mrb[0].mxu0 %v1104
    %v1233 = vpop.f32.mrb[0].mxu0
    %v1234 = vadd.f32 0.0, %v1233
    %v1235 = vpop.f32.mrb[0].mxu0
    %v1236 = vadd.f32 0.0, %v1235
    %1237 = vmatprep.mubr.f32.mxu0 0.0
    %1238 = vmatmul.mubr.f32.gmra.mrb[0].mxu0 %v1105
    %v1239 = vpop.f32.mrb[0].mxu0
    %v1240 = vadd.f32 0.0, %v1239
    %v1241 = vpop.f32.mrb[0].mxu0
    %v1242 = vadd.f32 0.0, %v1241
    %1243 = vdwg.mxu0
    %1244 = vmatprep.subr.mxu0 0.0
    %1245 = vmatpush1.msra.mxu0 %v1109
    %1246 = vmatprep.subr.mxu0 0.0
    %1247 = vmatpush1.msra.mxu0 %v1112
    %1248 = vmatprep.subr.mxu0 0.0
    %1249 = vmatpush1.msra.mxu0 %v1115
    %1250 = vmatprep.subr.mxu0 0.0
    %1251 = vmatpush1.msra.mxu0 %v1118
    %1252 = vmatprep.subr.mxu0 0.0
    %1253 = vmatpush1.msra.mxu0 %v1121
    %1254 = vmatprep.subr.mxu0 0.0
    %1255 = vmatpush1.msra.mxu0 %v1124
    %1256 = vmatprep.subr.mxu0 0.0
    %1257 = vmatpush1.msra.mxu0 %v1127
    %1258 = vmatprep.subr.mxu0 0.0
    %1259 = vmatpush1.msra.mxu0 %v1130
    %1260 = vmatprep.subr.mxu0 0.0
    %1261 = vmatpush1.msra.mxu0 %v1133
    %1262 = vmatprep.subr.mxu0 0.0
    %1263 = vmatpush1.msra.mxu0 %v1136
    %1264 = vmatprep.subr.mxu0 0.0
    %1265 = vmatpush1.msra.mxu0 %v1139
    %1266 = vmatprep.subr.mxu0 0.0
    %1267 = vmatpush1.msra.mxu0 %v1142
    %1268 = vmatprep.subr.mxu0 0.0
    %1269 = vmatpush1.msra.mxu0 %v1145
    %1270 = vmatprep.subr.mxu0 0.0
    %1271 = vmatpush1.msra.mxu0 %v1148
    %1272 = vmatprep.subr.mxu0 0.0
    %1273 = vmatpush1.msra.mxu0 %v1151
    %1274 = vmatprep.subr.mxu0 0.0
    %1275 = vmatpush1.msra.mxu0 %v1154
    %1276 = vmatprep.subr.mxu0 0.0
    %1277 = vmatpush1.msra.mxu0 0.0
    %1278 = vmatprep.subr.mxu0 0.0
    %1279 = vmatpush1.msra.mxu0 0.0
    %1280 = vmatprep.subr.mxu0 0.0
    %1281 = vmatpush1.msra.mxu0 0.0
    %1282 = vmatprep.subr.mxu0 0.0
    %1283 = vmatpush1.msra.mxu0 0.0
    %1284 = vmatprep.subr.mxu0 0.0
    %1285 = vmatpush1.msra.mxu0 0.0
    %1286 = vmatprep.subr.mxu0 0.0
    %1287 = vmatpush1.msra.mxu0 0.0
    %1288 = vmatprep.subr.mxu0 0.0
    %1289 = vmatpush1.msra.mxu0 0.0
    %1290 = vmatprep.subr.mxu0 0.0
    %1291 = vmatpush1.msra.mxu0 0.0
    %1292 = vmatprep.subr.mxu0 0.0
    %1293 = vmatpush1.msra.mxu0 0.0
    %1294 = vmatprep.subr.mxu0 0.0
    %1295 = vmatpush1.msra.mxu0 0.0
    %1296 = vmatprep.subr.mxu0 0.0
    %1297 = vmatpush1.msra.mxu0 0.0
    %1298 = vmatprep.subr.mxu0 0.0
    %1299 = vmatpush1.msra.mxu0 0.0
    %1300 = vmatprep.subr.mxu0 0.0
    %1301 = vmatpush1.msra.mxu0 0.0
    %1302 = vmatprep.subr.mxu0 0.0
    %1303 = vmatpush1.msra.mxu0 0.0
    %1304 = vmatprep.subr.mxu0 0.0
    %1305 = vmatpush1.msra.mxu0 0.0
    %1306 = vmatprep.subr.mxu0 0.0
    %1307 = vmatpush1.msra.mxu0 0.0
    %1308 = vmatprep.mubr.f32.mxu0 0.0
    %1309 = vmatmul.mubr.f32.gmra.mrb[0].mxu0 %v1102
    %v1310 = vpop.f32.mrb[0].mxu0
    %v1311 = vadd.f32 0.0, %v1310
    %v1312 = vpop.f32.mrb[0].mxu0
    %1313 = vmatprep.mubr.f32.mxu0 0.0
    %1314 = vmatmul.mubr.f32.gmra.mrb[0].mxu0 %v1103
    %v1315 = vpop.f32.mrb[0].mxu0
    %v1316 = vadd.f32 0.0, %v1315
    %v1317 = vpop.f32.mrb[0].mxu0
    %1318 = vmatprep.mubr.f32.mxu0 0.0
    %1319 = vmatmul.mubr.f32.gmra.mrb[0].mxu0 %v1104
    %v1320 = vpop.f32.mrb[0].mxu0
    %v1321 = vadd.f32 0.0, %v1320
    %v1322 = vpop.f32.mrb[0].mxu0
    %1323 = vmatprep.mubr.f32.mxu0 0.0
    %1324 = vmatmul.mubr.f32.gmra.mrb[0].mxu0 %v1105
    %v1325 = vpop.f32.mrb[0].mxu0
    %v1326 = vadd.f32 0.0, %v1325
    %v1327 = vpop.f32.mrb[0].mxu0
    %1328 = vdwg.mxu0
    %v1329 = vrot.slane %v1222, 4
    %v1330 = vrot.slane %v1228, 4
    %v1331 = vrot.slane %v1234, 4
    %v1332 = vrot.slane %v1240, 4
    %vm1333 = vcmp.lt.s32.totalorder %v179, 4
    %v1334 = vsel %vm1333, %v1331, %v1332
    %v1335 = vsel %vm1333, %v1330, %v1331
    %v1336 = vsel %vm1333, %v1329, %v1330
    %v1337 = vsel %vm1333, %v1332, %v1329
    %vm1338 = vcmp.ge.s32.totalorder %v227, 4
    %vm1339 = vcmp.ge.s32.totalorder %v228, 4
    %vm1340 = vcmp.ge.s32.totalorder %v229, 4
    %vm1341 = vcmp.ge.s32.totalorder %v230, 4
    %v1342 = vsel %vm1338, 1, 0
    %v1343 = vsel %vm1339, 1, 0
    %v1344 = vsel %vm1340, 1, 0
    %v1345 = vsel %vm1341, 1, 0
    %vm1346 = vcmp.eq.s32.totalorder %v1342, 1
    %vm1347 = vcmp.eq.s32.totalorder %v1343, 1
    %vm1348 = vcmp.eq.s32.totalorder %v1344, 1
    %vm1349 = vcmp.eq.s32.totalorder %v1345, 1
    %v1350 = vsel %vm1346, %v1337, 0.0
    %v1351 = vsel %vm1347, %v1336, 0.0
    %v1352 = vsel %vm1348, %v1335, 0.0
    %v1353 = vsel %vm1349, %v1334, 0.0
    %v1354 = vadd.f32 %v1224, %v1350
    %v1355 = vadd.f32 %v1230, %v1351
    %v1356 = vadd.f32 %v1236, %v1352
    %v1357 = vadd.f32 %v1242, %v1353
    %v1358 = vrot.slane %v1311, 4
    %v1359 = vrot.slane %v1316, 4
    %v1360 = vrot.slane %v1321, 4
    %v1361 = vrot.slane %v1326, 4
    %v1362 = vsel %vm1333, %v1360, %v1361
    %v1363 = vsel %vm1333, %v1359, %v1360
    %v1364 = vsel %vm1333, %v1358, %v1359
    %v1365 = vsel %vm1333, %v1361, %v1358
    %vm1366 = vcmp.lt.s32.totalorder %v227, 12
    %vm1367 = vcmp.lt.s32.totalorder %v228, 12
    %vm1368 = vcmp.lt.s32.totalorder %v229, 12
    %vm1369 = vcmp.lt.s32.totalorder %v230, 12
    %v1370 = vsel %vm1366, 1, 0
    %v1371 = vsel %vm1367, 1, 0
    %v1372 = vsel %vm1368, 1, 0
    %v1373 = vsel %vm1369, 1, 0
    %vm1374 = vcmp.eq.s32.totalorder %v1370, 1
    %vm1375 = vcmp.eq.s32.totalorder %v1371, 1
    %vm1376 = vcmp.eq.s32.totalorder %v1372, 1
    %vm1377 = vcmp.eq.s32.totalorder %v1373, 1
    %v1378 = vsel %vm1374, %v1364, 0.0
    %v1379 = vsel %vm1375, %v1363, 0.0
    %v1380 = vsel %vm1376, %v1362, 0.0
    %v1381 = vsel %vm1377, %v1365, 0.0
    %v1382 = vadd.f32 %v1354, %v1378
    %v1383 = vadd.f32 %v1355, %v1379
    %v1384 = vadd.f32 %v1356, %v1380
    %v1385 = vadd.f32 %v1357, %v1381
    %v1386 = vtanh.pop %v1382
    %v1387 = vtanh.pop %v1383
    %v1388 = vtanh.pop %v1384
    %v1389 = vtanh.pop %v1385
    %v1390 = vxor.u32 %v1382, 2147483648
    %v1391 = vxor.u32 %v1383, 2147483648
    %v1392 = vxor.u32 %v1384, 2147483648
    %v1393 = vxor.u32 %v1385, 2147483648
    %v1394 = vmul.f32 %v1390, 1.442695
    %v1395 = vpow.pop %v1394
    %v1396 = vmul.f32 %v1391, 1.442695
    %v1397 = vpow.pop %v1396
    %v1398 = vmul.f32 %v1392, 1.442695
    %v1399 = vpow.pop %v1398
    %v1400 = vmul.f32 %v1393, 1.442695
    %v1401 = vpow.pop %v1400
    %v1402 = vadd.f32 %v1395, 1.0
    %v1403 = vadd.f32 %v1397, 1.0
    %v1404 = vadd.f32 %v1399, 1.0
    %v1405 = vadd.f32 %v1401, 1.0
    %v1406 = vrcp.pop %v1402
    %v1407 = vmul.f32 1.0, %v1406
    %v1408 = vrcp.pop %v1403
    %v1409 = vmul.f32 1.0, %v1408
    %v1410 = vrcp.pop %v1404
    %v1411 = vmul.f32 1.0, %v1410
    %v1412 = vrcp.pop %v1405
    %v1413 = vmul.f32 1.0, %v1412
    %1418 = vrot.lane.b32.xlu0 %v1407, 112
    %v1419 = vpop.permute.xlu0 %1418
    %1420 = vrot.lane.b32.xlu0 %v1409, 112
    %v1421 = vpop.permute.xlu0 %1420
    %1422 = vrot.lane.b32.xlu0 %v1411, 112
    %v1423 = vpop.permute.xlu0 %1422
    %1424 = vrot.lane.b32.xlu0 %v1413, 112
    %v1425 = vpop.permute.xlu0 %1424
    %v1430 = vmul.f32 %v1386, %v1419
    %v1431 = vmul.f32 %v1387, %v1421
    %v1432 = vmul.f32 %v1388, %v1423
    %v1433 = vmul.f32 %v1389, %v1425
    %s1434 = scalar_lea.vmem [#allocation7], 48
    %v1435 = vld [vmem:[%s1434] sm:$0xff]
    %v1436 = vld [vmem:[%s1434 + $0x8] sm:$0xff]
    %v1437 = vld [vmem:[%s1434 + $0x10] sm:$0x1]
    %v1438 = vlaneseq
    %v1439 = vshrl.u32 %v1438, 7
    %v1440 = vsub.s32 0, %v1439
    %v1441 = vrot.slane %v1437, %v1440
    %v1443 = vsel %vm566, %v1430, 0
    %v1446 = vsel %vm566, %v1431, 0
    %v1449 = vsel %vm566, %v1432, 0
    %v1452 = vsel %vm566, %v1433, 0
    %1454 = vmatprep.subr.mxu0 0.0
    %1455 = vmatpush1.msra.mxu0 %v1435
    %1456 = vmatprep.subr.mxu0 0.0
    %1457 = vmatpush1.msra.mxu0 %v1436
    %1458 = vmatprep.subr.mxu0 0.0
    %1459 = vmatpush1.msra.mxu0 0.0
    %1460 = vmatprep.subr.mxu0 0.0
    %1461 = vmatpush1.msra.mxu0 0.0
    %1462 = vmatprep.subr.mxu0 0.0
    %1463 = vmatpush1.msra.mxu0 0.0
    %1464 = vmatprep.subr.mxu0 0.0
    %1465 = vmatpush1.msra.mxu0 0.0
    %1466 = vmatprep.subr.mxu0 0.0
    %1467 = vmatpush1.msra.mxu0 0.0
    %1468 = vmatprep.subr.mxu0 0.0
    %1469 = vmatpush1.msra.mxu0 0.0
    %1470 = vmatprep.subr.mxu0 0.0
    %1471 = vmatpush1.msra.mxu0 0.0
    %1472 = vmatprep.subr.mxu0 0.0
    %1473 = vmatpush1.msra.mxu0 0.0
    %1474 = vmatprep.subr.mxu0 0.0
    %1475 = vmatpush1.msra.mxu0 0.0
    %1476 = vmatprep.subr.mxu0 0.0
    %1477 = vmatpush1.msra.mxu0 0.0
    %1478 = vmatprep.subr.mxu0 0.0
    %1479 = vmatpush1.msra.mxu0 0.0
    %1480 = vmatprep.subr.mxu0 0.0
    %1481 = vmatpush1.msra.mxu0 0.0
    %1482 = vmatprep.subr.mxu0 0.0
    %1483 = vmatpush1.msra.mxu0 0.0
    %1484 = vmatprep.subr.mxu0 0.0
    %1485 = vmatpush1.msra.mxu0 0.0
    %1486 = vmatprep.subr.mxu0 0.0
    %1487 = vmatpush1.msra.mxu0 0.0
    %1488 = vmatprep.subr.mxu0 0.0
    %1489 = vmatpush1.msra.mxu0 0.0
    %1490 = vmatprep.subr.mxu0 0.0
    %1491 = vmatpush1.msra.mxu0 0.0
    %1492 = vmatprep.subr.mxu0 0.0
    %1493 = vmatpush1.msra.mxu0 0.0
    %1494 = vmatprep.subr.mxu0 0.0
    %1495 = vmatpush1.msra.mxu0 0.0
    %1496 = vmatprep.subr.mxu0 0.0
    %1497 = vmatpush1.msra.mxu0 0.0
    %1498 = vmatprep.subr.mxu0 0.0
    %1499 = vmatpush1.msra.mxu0 0.0
    %1500 = vmatprep.subr.mxu0 0.0
    %1501 = vmatpush1.msra.mxu0 0.0
    %1502 = vmatprep.subr.mxu0 0.0
    %1503 = vmatpush1.msra.mxu0 0.0
    %1504 = vmatprep.subr.mxu0 0.0
    %1505 = vmatpush1.msra.mxu0 0.0
    %1506 = vmatprep.subr.mxu0 0.0
    %1507 = vmatpush1.msra.mxu0 0.0
    %1508 = vmatprep.subr.mxu0 0.0
    %1509 = vmatpush1.msra.mxu0 0.0
    %1510 = vmatprep.subr.mxu0 0.0
    %1511 = vmatpush1.msra.mxu0 0.0
    %1512 = vmatprep.subr.mxu0 0.0
    %1513 = vmatpush1.msra.mxu0 0.0
    %1514 = vmatprep.subr.mxu0 0.0
    %1515 = vmatpush1.msra.mxu0 0.0
    %1516 = vmatprep.subr.mxu0 0.0
    %1517 = vmatpush1.msra.mxu0 0.0
    %1518 = vmatprep.mubr.f32.mxu0 0.0
    %1519 = vmatmul.mubr.f32.gmra.mrb[0].mxu0 %v1443
    %v1520 = vpop.f32.mrb[0].mxu0
    %v1521 = vadd.f32 %v1441, %v1520
    %v1522 = vpop.f32.mrb[0].mxu0
    %1523 = vmatprep.mubr.f32.mxu0 0.0
    %1524 = vmatmul.mubr.f32.gmra.mrb[0].mxu0 %v1446
    %v1525 = vpop.f32.mrb[0].mxu0
    %v1526 = vadd.f32 %v1441, %v1525
    %v1527 = vpop.f32.mrb[0].mxu0
    %1528 = vmatprep.mubr.f32.mxu0 0.0
    %1529 = vmatmul.mubr.f32.gmra.mrb[0].mxu0 %v1449
    %v1530 = vpop.f32.mrb[0].mxu0
    %v1531 = vadd.f32 %v1441, %v1530
    %v1532 = vpop.f32.mrb[0].mxu0
    %1533 = vmatprep.mubr.f32.mxu0 0.0
    %1534 = vmatmul.mubr.f32.gmra.mrb[0].mxu0 %v1452
    %v1535 = vpop.f32.mrb[0].mxu0
    %v1536 = vadd.f32 %v1441, %v1535
    %v1537 = vpop.f32.mrb[0].mxu0
    %1538 = vdwg.mxu0
    %v1539 = vadd.f32 %v1102, %v1521
    %v1540 = vadd.f32 %v1103, %v1526
    %v1541 = vadd.f32 %v1104, %v1531
    %v1542 = vadd.f32 %v1105, %v1536
    %s1543 = scalar_lea.vmem [#allocation5], 1152
    %v1544 = vld [vmem:[%s1543] sm:$0xff]
    %v1545 = vld [vmem:[%s1543 + $0x8] sm:$0xff]
    %v1546 = vld [vmem:[%s1543 + $0x10] sm:$0xff]
    %v1547 = vld [vmem:[%s1543 + $0x18] sm:$0xff]
    %v1548 = vld [vmem:[%s1543 + $0x20] sm:$0xff]
    %v1549 = vld [vmem:[%s1543 + $0x28] sm:$0xff]
    %v1550 = vld [vmem:[%s1543 + $0x30] sm:$0xff]
    %v1551 = vld [vmem:[%s1543 + $0x38] sm:$0xff]
    %v1552 = vld [vmem:[%s1543 + $0x40] sm:$0xff]
    %v1553 = vld [vmem:[%s1543 + $0x48] sm:$0xff]
    %v1554 = vld [vmem:[%s1543 + $0x50] sm:$0xff]
    %v1555 = vld [vmem:[%s1543 + $0x58] sm:$0xff]
    %v1556 = vld [vmem:[%s1543 + $0x60] sm:$0xff]
    %v1557 = vld [vmem:[%s1543 + $0x68] sm:$0xff]
    %v1558 = vld [vmem:[%s1543 + $0x70] sm:$0xff]
    %v1559 = vld [vmem:[%s1543 + $0x78] sm:$0xff]
    %v1560 = vld [vmem:[%s1543 + $0x80] sm:$0xff]
    %v1561 = vld [vmem:[%s1543 + $0x88] sm:$0xff]
    %v1562 = vld [vmem:[%s1543 + $0x90] sm:$0xff]
    %v1563 = vld [vmem:[%s1543 + $0x98] sm:$0xff]
    %v1564 = vld [vmem:[%s1543 + $0xa0] sm:$0xff]
    %v1565 = vld [vmem:[%s1543 + $0xa8] sm:$0xff]
    %v1566 = vld [vmem:[%s1543 + $0xb0] sm:$0xff]
    %v1567 = vld [vmem:[%s1543 + $0xb8] sm:$0xff]
    %v1568 = vld [vmem:[%s1543 + $0xc0] sm:$0xff]
    %v1569 = vld [vmem:[%s1543 + $0xc8] sm:$0xff]
    %v1570 = vld [vmem:[%s1543 + $0xd0] sm:$0xff]
    %v1571 = vld [vmem:[%s1543 + $0xd8] sm:$0xff]
    %v1572 = vld [vmem:[%s1543 + $0xe0] sm:$0xff]
    %v1573 = vld [vmem:[%s1543 + $0xe8] sm:$0xff]
    %v1574 = vld [vmem:[%s1543 + $0xf0] sm:$0xff]
    %v1575 = vld [vmem:[%s1543 + $0xf8] sm:$0xff]
    %v1576 = vld [vmem:[%s1543 + $0x100] sm:$0xff]
    %v1577 = vld [vmem:[%s1543 + $0x108] sm:$0xff]
    %v1578 = vld [vmem:[%s1543 + $0x110] sm:$0xff]
    %v1579 = vld [vmem:[%s1543 + $0x118] sm:$0xff]
    %v1580 = vld [vmem:[%s1543 + $0x120] sm:$0xff]
    %v1581 = vld [vmem:[%s1543 + $0x128] sm:$0xff]
    %v1582 = vld [vmem:[%s1543 + $0x130] sm:$0xff]
    %v1583 = vld [vmem:[%s1543 + $0x138] sm:$0xff]
    %v1584 = vld [vmem:[%s1543 + $0x140] sm:$0xff]
    %v1585 = vld [vmem:[%s1543 + $0x148] sm:$0xff]
    %v1586 = vld [vmem:[%s1543 + $0x150] sm:$0xff]
    %v1587 = vld [vmem:[%s1543 + $0x158] sm:$0xff]
    %v1588 = vld [vmem:[%s1543 + $0x160] sm:$0xff]
    %v1589 = vld [vmem:[%s1543 + $0x168] sm:$0xff]
    %v1590 = vld [vmem:[%s1543 + $0x170] sm:$0xff]
    %v1591 = vld [vmem:[%s1543 + $0x178] sm:$0xff]
    %1592 = vmatprep.subr.mxu0 %v1545
    %1593 = vmatpush1.msra.mxu0 %v1544
    %1594 = vmatprep.subr.mxu0 %v1548
    %1595 = vmatpush1.msra.mxu0 %v1547
    %1596 = vmatprep.subr.mxu0 %v1551
    %1597 = vmatpush1.msra.mxu0 %v1550
    %1598 = vmatprep.subr.mxu0 %v1554
    %1599 = vmatpush1.msra.mxu0 %v1553
    %1600 = vmatprep.subr.mxu0 %v1557
    %1601 = vmatpush1.msra.mxu0 %v1556
    %1602 = vmatprep.subr.mxu0 %v1560
    %1603 = vmatpush1.msra.mxu0 %v1559
    %1604 = vmatprep.subr.mxu0 %v1563
    %1605 = vmatpush1.msra.mxu0 %v1562
    %1606 = vmatprep.subr.mxu0 %v1566
    %1607 = vmatpush1.msra.mxu0 %v1565
    %1608 = vmatprep.subr.mxu0 %v1569
    %1609 = vmatpush1.msra.mxu0 %v1568
    %1610 = vmatprep.subr.mxu0 %v1572
    %1611 = vmatpush1.msra.mxu0 %v1571
    %1612 = vmatprep.subr.mxu0 %v1575
    %1613 = vmatpush1.msra.mxu0 %v1574
    %1614 = vmatprep.subr.mxu0 %v1578
    %1615 = vmatpush1.msra.mxu0 %v1577
    %1616 = vmatprep.subr.mxu0 %v1581
    %1617 = vmatpush1.msra.mxu0 %v1580
    %1618 = vmatprep.subr.mxu0 %v1584
    %1619 = vmatpush1.msra.mxu0 %v1583
    %1620 = vmatprep.subr.mxu0 %v1587
    %1621 = vmatpush1.msra.mxu0 %v1586
    %1622 = vmatprep.subr.mxu0 %v1590
    %1623 = vmatpush1.msra.mxu0 %v1589
    %1624 = vmatprep.subr.mxu0 0.0
    %1625 = vmatpush1.msra.mxu0 0.0
    %1626 = vmatprep.subr.mxu0 0.0
    %1627 = vmatpush1.msra.mxu0 0.0
    %1628 = vmatprep.subr.mxu0 0.0
    %1629 = vmatpush1.msra.mxu0 0.0
    %1630 = vmatprep.subr.mxu0 0.0
    %1631 = vmatpush1.msra.mxu0 0.0
    %1632 = vmatprep.subr.mxu0 0.0
    %1633 = vmatpush1.msra.mxu0 0.0
    %1634 = vmatprep.subr.mxu0 0.0
    %1635 = vmatpush1.msra.mxu0 0.0
    %1636 = vmatprep.subr.mxu0 0.0
    %1637 = vmatpush1.msra.mxu0 0.0
    %1638 = vmatprep.subr.mxu0 0.0
    %1639 = vmatpush1.msra.mxu0 0.0
    %1640 = vmatprep.subr.mxu0 0.0
    %1641 = vmatpush1.msra.mxu0 0.0
    %1642 = vmatprep.subr.mxu0 0.0
    %1643 = vmatpush1.msra.mxu0 0.0
    %1644 = vmatprep.subr.mxu0 0.0
    %1645 = vmatpush1.msra.mxu0 0.0
    %1646 = vmatprep.subr.mxu0 0.0
    %1647 = vmatpush1.msra.mxu0 0.0
    %1648 = vmatprep.subr.mxu0 0.0
    %1649 = vmatpush1.msra.mxu0 0.0
    %1650 = vmatprep.subr.mxu0 0.0
    %1651 = vmatpush1.msra.mxu0 0.0
    %1652 = vmatprep.subr.mxu0 0.0
    %1653 = vmatpush1.msra.mxu0 0.0
    %1654 = vmatprep.subr.mxu0 0.0
    %1655 = vmatpush1.msra.mxu0 0.0
    %1656 = vmatprep.mubr.f32.mxu0 0.0
    %1657 = vmatmul.mubr.f32.gmra.mrb[0].mxu0 %v1539
    %v1658 = vpop.f32.mrb[0].mxu0
    %v1659 = vadd.f32 0.0, %v1658
    %v1660 = vpop.f32.mrb[0].mxu0
    %v1661 = vadd.f32 0.0, %v1660
    %1662 = vmatprep.mubr.f32.mxu0 0.0
    %1663 = vmatmul.mubr.f32.gmra.mrb[0].mxu0 %v1540
    %v1664 = vpop.f32.mrb[0].mxu0
    %v1665 = vadd.f32 0.0, %v1664
    %v1666 = vpop.f32.mrb[0].mxu0
    %v1667 = vadd.f32 0.0, %v1666
    %1668 = vmatprep.mubr.f32.mxu0 0.0
    %1669 = vmatmul.mubr.f32.gmra.mrb[0].mxu0 %v1541
    %v1670 = vpop.f32.mrb[0].mxu0
    %v1671 = vadd.f32 0.0, %v1670
    %v1672 = vpop.f32.mrb[0].mxu0
    %v1673 = vadd.f32 0.0, %v1672
    %1674 = vmatprep.mubr.f32.mxu0 0.0
    %1675 = vmatmul.mubr.f32.gmra.mrb[0].mxu0 %v1542
    %v1676 = vpop.f32.mrb[0].mxu0
    %v1677 = vadd.f32 0.0, %v1676
    %v1678 = vpop.f32.mrb[0].mxu0
    %v1679 = vadd.f32 0.0, %v1678
    %1680 = vdwg.mxu0
    %1681 = vmatprep.subr.mxu0 0.0
    %1682 = vmatpush1.msra.mxu0 %v1546
    %1683 = vmatprep.subr.mxu0 0.0
    %1684 = vmatpush1.msra.mxu0 %v1549
    %1685 = vmatprep.subr.mxu0 0.0
    %1686 = vmatpush1.msra.mxu0 %v1552
    %1687 = vmatprep.subr.mxu0 0.0
    %1688 = vmatpush1.msra.mxu0 %v1555
    %1689 = vmatprep.subr.mxu0 0.0
    %1690 = vmatpush1.msra.mxu0 %v1558
    %1691 = vmatprep.subr.mxu0 0.0
    %1692 = vmatpush1.msra.mxu0 %v1561
    %1693 = vmatprep.subr.mxu0 0.0
    %1694 = vmatpush1.msra.mxu0 %v1564
    %1695 = vmatprep.subr.mxu0 0.0
    %1696 = vmatpush1.msra.mxu0 %v1567
    %1697 = vmatprep.subr.mxu0 0.0
    %1698 = vmatpush1.msra.mxu0 %v1570
    %1699 = vmatprep.subr.mxu0 0.0
    %1700 = vmatpush1.msra.mxu0 %v1573
    %1701 = vmatprep.subr.mxu0 0.0
    %1702 = vmatpush1.msra.mxu0 %v1576
    %1703 = vmatprep.subr.mxu0 0.0
    %1704 = vmatpush1.msra.mxu0 %v1579
    %1705 = vmatprep.subr.mxu0 0.0
    %1706 = vmatpush1.msra.mxu0 %v1582
    %1707 = vmatprep.subr.mxu0 0.0
    %1708 = vmatpush1.msra.mxu0 %v1585
    %1709 = vmatprep.subr.mxu0 0.0
    %1710 = vmatpush1.msra.mxu0 %v1588
    %1711 = vmatprep.subr.mxu0 0.0
    %1712 = vmatpush1.msra.mxu0 %v1591
    %1713 = vmatprep.subr.mxu0 0.0
    %1714 = vmatpush1.msra.mxu0 0.0
    %1715 = vmatprep.subr.mxu0 0.0
    %1716 = vmatpush1.msra.mxu0 0.0
    %1717 = vmatprep.subr.mxu0 0.0
    %1718 = vmatpush1.msra.mxu0 0.0
    %1719 = vmatprep.subr.mxu0 0.0
    %1720 = vmatpush1.msra.mxu0 0.0
    %1721 = vmatprep.subr.mxu0 0.0
    %1722 = vmatpush1.msra.mxu0 0.0
    %1723 = vmatprep.subr.mxu0 0.0
    %1724 = vmatpush1.msra.mxu0 0.0
    %1725 = vmatprep.subr.mxu0 0.0
    %1726 = vmatpush1.msra.mxu0 0.0
    %1727 = vmatprep.subr.mxu0 0.0
    %1728 = vmatpush1.msra.mxu0 0.0
    %1729 = vmatprep.subr.mxu0 0.0
    %1730 = vmatpush1.msra.mxu0 0.0
    %1731 = vmatprep.subr.mxu0 0.0
    %1732 = vmatpush1.msra.mxu0 0.0
    %1733 = vmatprep.subr.mxu0 0.0
    %1734 = vmatpush1.msra.mxu0 0.0
    %1735 = vmatprep.subr.mxu0 0.0
    %1736 = vmatpush1.msra.mxu0 0.0
    %1737 = vmatprep.subr.mxu0 0.0
    %1738 = vmatpush1.msra.mxu0 0.0
    %1739 = vmatprep.subr.mxu0 0.0
    %1740 = vmatpush1.msra.mxu0 0.0
    %1741 = vmatprep.subr.mxu0 0.0
    %1742 = vmatpush1.msra.mxu0 0.0
    %1743 = vmatprep.subr.mxu0 0.0
    %1744 = vmatpush1.msra.mxu0 0.0
    %1745 = vmatprep.mubr.f32.mxu0 0.0
    %1746 = vmatmul.mubr.f32.gmra.mrb[0].mxu0 %v1539
    %v1747 = vpop.f32.mrb[0].mxu0
    %v1748 = vadd.f32 0.0, %v1747
    %v1749 = vpop.f32.mrb[0].mxu0
    %1750 = vmatprep.mubr.f32.mxu0 0.0
    %1751 = vmatmul.mubr.f32.gmra.mrb[0].mxu0 %v1540
    %v1752 = vpop.f32.mrb[0].mxu0
    %v1753 = vadd.f32 0.0, %v1752
    %v1754 = vpop.f32.mrb[0].mxu0
    %1755 = vmatprep.mubr.f32.mxu0 0.0
    %1756 = vmatmul.mubr.f32.gmra.mrb[0].mxu0 %v1541
    %v1757 = vpop.f32.mrb[0].mxu0
    %v1758 = vadd.f32 0.0, %v1757
    %v1759 = vpop.f32.mrb[0].mxu0
    %1760 = vmatprep.mubr.f32.mxu0 0.0
    %1761 = vmatmul.mubr.f32.gmra.mrb[0].mxu0 %v1542
    %v1762 = vpop.f32.mrb[0].mxu0
    %v1763 = vadd.f32 0.0, %v1762
    %v1764 = vpop.f32.mrb[0].mxu0
    %1765 = vdwg.mxu0
    %vm1766 = vcmp.ge.s32.totalorder %v227, 8
    %vm1767 = vcmp.ge.s32.totalorder %v228, 8
    %vm1768 = vcmp.ge.s32.totalorder %v229, 8
    %vm1769 = vcmp.ge.s32.totalorder %v230, 8
    %v1770 = vsel %vm1766, 1, 0
    %v1771 = vsel %vm1767, 1, 0
    %v1772 = vsel %vm1768, 1, 0
    %v1773 = vsel %vm1769, 1, 0
    %vm1774 = vcmp.eq.s32.totalorder %v1770, 1
    %vm1775 = vcmp.eq.s32.totalorder %v1771, 1
    %vm1776 = vcmp.eq.s32.totalorder %v1772, 1
    %vm1777 = vcmp.eq.s32.totalorder %v1773, 1
    %v1778 = vsel %vm1774, %v1677, 0.0
    %v1779 = vsel %vm1775, %v1659, 0.0
    %v1780 = vsel %vm1776, %v1665, 0.0
    %v1781 = vsel %vm1777, %v1671, 0.0
    %v1782 = vadd.f32 %v1661, %v1778
    %v1783 = vadd.f32 %v1667, %v1779
    %v1784 = vadd.f32 %v1673, %v1780
    %v1785 = vadd.f32 %v1679, %v1781
    %vm1786 = vcmp.lt.s32.totalorder %v227, 8
    %vm1787 = vcmp.lt.s32.totalorder %v228, 8
    %vm1788 = vcmp.lt.s32.totalorder %v229, 8
    %vm1789 = vcmp.lt.s32.totalorder %v230, 8
    %v1790 = vsel %vm1786, 1, 0
    %v1791 = vsel %vm1787, 1, 0
    %v1792 = vsel %vm1788, 1, 0
    %v1793 = vsel %vm1789, 1, 0
    %vm1794 = vcmp.eq.s32.totalorder %v1790, 1
    %vm1795 = vcmp.eq.s32.totalorder %v1791, 1
    %vm1796 = vcmp.eq.s32.totalorder %v1792, 1
    %vm1797 = vcmp.eq.s32.totalorder %v1793, 1
    %v1798 = vsel %vm1794, %v1753, 0.0
    %v1799 = vsel %vm1795, %v1758, 0.0
    %v1800 = vsel %vm1796, %v1763, 0.0
    %v1801 = vsel %vm1797, %v1748, 0.0
    %v1802 = vadd.f32 %v1782, %v1798
    %v1803 = vadd.f32 %v1783, %v1799
    %v1804 = vadd.f32 %v1784, %v1800
    %v1805 = vadd.f32 %v1785, %v1801
    %v1806 = vtanh.pop %v1802
    %v1807 = vtanh.pop %v1803
    %v1808 = vtanh.pop %v1804
    %v1809 = vtanh.pop %v1805
    %v1810 = vxor.u32 %v1802, 2147483648
    %v1811 = vxor.u32 %v1803, 2147483648
    %v1812 = vxor.u32 %v1804, 2147483648
    %v1813 = vxor.u32 %v1805, 2147483648
    %v1814 = vmul.f32 %v1810, 1.442695
    %v1815 = vpow.pop %v1814
    %v1816 = vmul.f32 %v1811, 1.442695
    %v1817 = vpow.pop %v1816
    %v1818 = vmul.f32 %v1812, 1.442695
    %v1819 = vpow.pop %v1818
    %v1820 = vmul.f32 %v1813, 1.442695
    %v1821 = vpow.pop %v1820
    %v1822 = vadd.f32 %v1815, 1.0
    %v1823 = vadd.f32 %v1817, 1.0
    %v1824 = vadd.f32 %v1819, 1.0
    %v1825 = vadd.f32 %v1821, 1.0
    %v1826 = vrcp.pop %v1822
    %v1827 = vmul.f32 1.0, %v1826
    %v1828 = vrcp.pop %v1823
    %v1829 = vmul.f32 1.0, %v1828
    %v1830 = vrcp.pop %v1824
    %v1831 = vmul.f32 1.0, %v1830
    %v1832 = vrcp.pop %v1825
    %v1833 = vmul.f32 1.0, %v1832
    %1838 = vrot.lane.b32.xlu0 %v1827, 112
    %v1839 = vpop.permute.xlu0 %1838
    %1840 = vrot.lane.b32.xlu0 %v1829, 112
    %v1841 = vpop.permute.xlu0 %1840
    %1842 = vrot.lane.b32.xlu0 %v1831, 112
    %v1843 = vpop.permute.xlu0 %1842
    %1844 = vrot.lane.b32.xlu0 %v1833, 112
    %v1845 = vpop.permute.xlu0 %1844
    %v1850 = vmul.f32 %v1806, %v1839
    %v1851 = vmul.f32 %v1807, %v1841
    %v1852 = vmul.f32 %v1808, %v1843
    %v1853 = vmul.f32 %v1809, %v1845
    %s1854 = scalar_lea.vmem [#allocation7], 72
    %v1855 = vld [vmem:[%s1854] sm:$0xff]
    %v1856 = vld [vmem:[%s1854 + $0x8] sm:$0xff]
    %v1857 = vld [vmem:[%s1854 + $0x10] sm:$0x1]
    %v1858 = vlaneseq
    %v1859 = vshrl.u32 %v1858, 7
    %v1860 = vsub.s32 0, %v1859
    %v1861 = vrot.slane %v1857, %v1860
    %v1863 = vsel %vm566, %v1850, 0
    %v1866 = vsel %vm566, %v1851, 0
    %v1869 = vsel %vm566, %v1852, 0
    %v1872 = vsel %vm566, %v1853, 0
    %1874 = vmatprep.subr.mxu0 0.0
    %1875 = vmatpush1.msra.mxu0 %v1855
    %1876 = vmatprep.subr.mxu0 0.0
    %1877 = vmatpush1.msra.mxu0 %v1856
    %1878 = vmatprep.subr.mxu0 0.0
    %1879 = vmatpush1.msra.mxu0 0.0
    %1880 = vmatprep.subr.mxu0 0.0
    %1881 = vmatpush1.msra.mxu0 0.0
    %1882 = vmatprep.subr.mxu0 0.0
    %1883 = vmatpush1.msra.mxu0 0.0
    %1884 = vmatprep.subr.mxu0 0.0
    %1885 = vmatpush1.msra.mxu0 0.0
    %1886 = vmatprep.subr.mxu0 0.0
    %1887 = vmatpush1.msra.mxu0 0.0
    %1888 = vmatprep.subr.mxu0 0.0
    %1889 = vmatpush1.msra.mxu0 0.0
    %1890 = vmatprep.subr.mxu0 0.0
    %1891 = vmatpush1.msra.mxu0 0.0
    %1892 = vmatprep.subr.mxu0 0.0
    %1893 = vmatpush1.msra.mxu0 0.0
    %1894 = vmatprep.subr.mxu0 0.0
    %1895 = vmatpush1.msra.mxu0 0.0
    %1896 = vmatprep.subr.mxu0 0.0
    %1897 = vmatpush1.msra.mxu0 0.0
    %1898 = vmatprep.subr.mxu0 0.0
    %1899 = vmatpush1.msra.mxu0 0.0
    %1900 = vmatprep.subr.mxu0 0.0
    %1901 = vmatpush1.msra.mxu0 0.0
    %1902 = vmatprep.subr.mxu0 0.0
    %1903 = vmatpush1.msra.mxu0 0.0
    %1904 = vmatprep.subr.mxu0 0.0
    %1905 = vmatpush1.msra.mxu0 0.0
    %1906 = vmatprep.subr.mxu0 0.0
    %1907 = vmatpush1.msra.mxu0 0.0
    %1908 = vmatprep.subr.mxu0 0.0
    %1909 = vmatpush1.msra.mxu0 0.0
    %1910 = vmatprep.subr.mxu0 0.0
    %1911 = vmatpush1.msra.mxu0 0.0
    %1912 = vmatprep.subr.mxu0 0.0
    %1913 = vmatpush1.msra.mxu0 0.0
    %1914 = vmatprep.subr.mxu0 0.0
    %1915 = vmatpush1.msra.mxu0 0.0
    %1916 = vmatprep.subr.mxu0 0.0
    %1917 = vmatpush1.msra.mxu0 0.0
    %1918 = vmatprep.subr.mxu0 0.0
    %1919 = vmatpush1.msra.mxu0 0.0
    %1920 = vmatprep.subr.mxu0 0.0
    %1921 = vmatpush1.msra.mxu0 0.0
    %1922 = vmatprep.subr.mxu0 0.0
    %1923 = vmatpush1.msra.mxu0 0.0
    %1924 = vmatprep.subr.mxu0 0.0
    %1925 = vmatpush1.msra.mxu0 0.0
    %1926 = vmatprep.subr.mxu0 0.0
    %1927 = vmatpush1.msra.mxu0 0.0
    %1928 = vmatprep.subr.mxu0 0.0
    %1929 = vmatpush1.msra.mxu0 0.0
    %1930 = vmatprep.subr.mxu0 0.0
    %1931 = vmatpush1.msra.mxu0 0.0
    %1932 = vmatprep.subr.mxu0 0.0
    %1933 = vmatpush1.msra.mxu0 0.0
    %1934 = vmatprep.subr.mxu0 0.0
    %1935 = vmatpush1.msra.mxu0 0.0
    %1936 = vmatprep.subr.mxu0 0.0
    %1937 = vmatpush1.msra.mxu0 0.0
    %1938 = vmatprep.mubr.f32.mxu0 0.0
    %1939 = vmatmul.mubr.f32.gmra.mrb[0].mxu0 %v1863
    %v1940 = vpop.f32.mrb[0].mxu0
    %v1941 = vadd.f32 %v1861, %v1940
    %v1942 = vpop.f32.mrb[0].mxu0
    %1943 = vmatprep.mubr.f32.mxu0 0.0
    %1944 = vmatmul.mubr.f32.gmra.mrb[0].mxu0 %v1866
    %v1945 = vpop.f32.mrb[0].mxu0
    %v1946 = vadd.f32 %v1861, %v1945
    %v1947 = vpop.f32.mrb[0].mxu0
    %1948 = vmatprep.mubr.f32.mxu0 0.0
    %1949 = vmatmul.mubr.f32.gmra.mrb[0].mxu0 %v1869
    %v1950 = vpop.f32.mrb[0].mxu0
    %v1951 = vadd.f32 %v1861, %v1950
    %v1952 = vpop.f32.mrb[0].mxu0
    %1953 = vmatprep.mubr.f32.mxu0 0.0
    %1954 = vmatmul.mubr.f32.gmra.mrb[0].mxu0 %v1872
    %v1955 = vpop.f32.mrb[0].mxu0
    %v1956 = vadd.f32 %v1861, %v1955
    %v1957 = vpop.f32.mrb[0].mxu0
    %1958 = vdwg.mxu0
    %v1959 = vadd.f32 %v1539, %v1941
    %v1960 = vadd.f32 %v1540, %v1946
    %v1961 = vadd.f32 %v1541, %v1951
    %v1962 = vadd.f32 %v1542, %v1956
    %1963 = vmatprep.subr.mxu0 0.0
    %1964 = vmatpush1.msra.mxu0 %v77
    %1965 = vmatprep.subr.mxu0 0.0
    %1966 = vmatpush1.msra.mxu0 %v78
    %1967 = vmatprep.subr.mxu0 0.0
    %1968 = vmatpush1.msra.mxu0 %v79
    %1969 = vmatprep.subr.mxu0 0.0
    %1970 = vmatpush1.msra.mxu0 %v80
    %1971 = vmatprep.subr.mxu0 0.0
    %1972 = vmatpush1.msra.mxu0 %v81
    %1973 = vmatprep.subr.mxu0 0.0
    %1974 = vmatpush1.msra.mxu0 %v82
    %1975 = vmatprep.subr.mxu0 0.0
    %1976 = vmatpush1.msra.mxu0 %v83
    %1977 = vmatprep.subr.mxu0 0.0
    %1978 = vmatpush1.msra.mxu0 %v84
    %1979 = vmatprep.subr.mxu0 0.0
    %1980 = vmatpush1.msra.mxu0 %v85
    %1981 = vmatprep.subr.mxu0 0.0
    %1982 = vmatpush1.msra.mxu0 %v86
    %1983 = vmatprep.subr.mxu0 0.0
    %1984 = vmatpush1.msra.mxu0 %v87
    %1985 = vmatprep.subr.mxu0 0.0
    %1986 = vmatpush1.msra.mxu0 %v88
    %1987 = vmatprep.subr.mxu0 0.0
    %1988 = vmatpush1.msra.mxu0 %v89
    %1989 = vmatprep.subr.mxu0 0.0
    %1990 = vmatpush1.msra.mxu0 %v90
    %1991 = vmatprep.subr.mxu0 0.0
    %1992 = vmatpush1.msra.mxu0 %v91
    %1993 = vmatprep.subr.mxu0 0.0
    %1994 = vmatpush1.msra.mxu0 %v92
    %1995 = vmatprep.subr.mxu0 0.0
    %1996 = vmatpush1.msra.mxu0 0.0
    %1997 = vmatprep.subr.mxu0 0.0
    %1998 = vmatpush1.msra.mxu0 0.0
    %1999 = vmatprep.subr.mxu0 0.0
    %2000 = vmatpush1.msra.mxu0 0.0
    %2001 = vmatprep.subr.mxu0 0.0
    %2002 = vmatpush1.msra.mxu0 0.0
    %2003 = vmatprep.subr.mxu0 0.0
    %2004 = vmatpush1.msra.mxu0 0.0
    %2005 = vmatprep.subr.mxu0 0.0
    %2006 = vmatpush1.msra.mxu0 0.0
    %2007 = vmatprep.subr.mxu0 0.0
    %2008 = vmatpush1.msra.mxu0 0.0
    %2009 = vmatprep.subr.mxu0 0.0
    %2010 = vmatpush1.msra.mxu0 0.0
    %2011 = vmatprep.subr.mxu0 0.0
    %2012 = vmatpush1.msra.mxu0 0.0
    %2013 = vmatprep.subr.mxu0 0.0
    %2014 = vmatpush1.msra.mxu0 0.0
    %2015 = vmatprep.subr.mxu0 0.0
    %2016 = vmatpush1.msra.mxu0 0.0
    %2017 = vmatprep.subr.mxu0 0.0
    %2018 = vmatpush1.msra.mxu0 0.0
    %2019 = vmatprep.subr.mxu0 0.0
    %2020 = vmatpush1.msra.mxu0 0.0
    %2021 = vmatprep.subr.mxu0 0.0
    %2022 = vmatpush1.msra.mxu0 0.0
    %2023 = vmatprep.subr.mxu0 0.0
    %2024 = vmatpush1.msra.mxu0 0.0
    %2025 = vmatprep.subr.mxu0 0.0
    %2026 = vmatpush1.msra.mxu0 0.0
    %2027 = vmatprep.mubr.f32.mxu0 0.0
    %2028 = vmatmul.mubr.f32.gmra.mrb[0].mxu0 %v1959
    %v2029 = vpop.f32.mrb[0].mxu0
    %v2030 = vadd.f32 0.0, %v2029
    %v2031 = vpop.f32.mrb[0].mxu0
    %2032 = vmatprep.mubr.f32.mxu0 0.0
    %2033 = vmatmul.mubr.f32.gmra.mrb[0].mxu0 %v1960
    %v2034 = vpop.f32.mrb[0].mxu0
    %v2035 = vadd.f32 0.0, %v2034
    %v2036 = vpop.f32.mrb[0].mxu0
    %2037 = vmatprep.mubr.f32.mxu0 0.0
    %2038 = vmatmul.mubr.f32.gmra.mrb[0].mxu0 %v1961
    %v2039 = vpop.f32.mrb[0].mxu0
    %v2040 = vadd.f32 0.0, %v2039
    %v2041 = vpop.f32.mrb[0].mxu0
    %2042 = vmatprep.mubr.f32.mxu0 0.0
    %2043 = vmatmul.mubr.f32.gmra.mrb[0].mxu0 %v1962
    %v2044 = vpop.f32.mrb[0].mxu0
    %v2045 = vadd.f32 0.0, %v2044
    %v2046 = vpop.f32.mrb[0].mxu0
    %2047 = vdwg.mxu0
    %2048 = vst [vmem:[#allocation8] sm:$0xff] %v2030
    %2049 = vst [vmem:[#allocation8 + $0x8] sm:$0xff] %v2035
    %2050 = vst [vmem:[#allocation8 + $0x10] sm:$0xff] %v2040
    %2051 = vst [vmem:[#allocation8 + $0x18] sm:$0xff] %v2045
    // Predicated region
    $region26: #{tpu_custom_call.1} parent=1 // pred_check
      _
    $region27: #{tpu_custom_call.1} parent=1 // pred_check_branch
      %2053 = sbr.rel (0) target = $region29
    $region28: #{tpu_custom_call.1} parent=1 // pred_region
      %s2055 = ssub.s32 512, 512
      %2056 = vsyncadd [#allocation4], %s2055
      %s2057 = sshll.u32 [#allocation8], 4
      %s2058 = int_to_ptr.vmem [resolvable:$true] %s2057
      %2063 = dma.vmem_to_hbm [thread:$0]  %s2058, 512, %s3, [#allocation4], 128, 128, 8
    $region29: #{tpu_custom_call.1} parent=1 // pred_fallthru
      _
    // Predicated region
    $region30: #{tpu_custom_call.1} parent=1 // pred_check
      _
    $region31: #{tpu_custom_call.1} parent=1 // pred_check_branch
      %2065 = sbr.rel (0) target = $region33
    $region32: #{tpu_custom_call.1} parent=1 // pred_region
      %2066 = dma.done [#allocation4], 512
    $region33: #{tpu_custom_call.1} parent=1 // pred_fallthru
      _
    %2067 = vsyncpa [#allocation3], 1
    %2068 = vsyncpa [#allocation6], 1
    %2069 = vsyncpa [#allocation4], 1

</llo_original>
